<compile_context>
chip_gen: v6e
topology: v6e:2x2x1
jax: 0.10.0
libtpu: 0.0.40
codegen_flags: <defaults>
</compile_context>

<pallas_src>
import functools

import jax
import jax.numpy as jnp
from jax.experimental import pallas as pl
from jax.experimental.pallas import tpu as pltpu

LANE = 128  # every channel dimension is padded to this for lane-dense matmuls/stores


# ----------------------------------------------------------------------------
# Kernel 1: fused per-modality TCN encoder + decoder (one grid step per modality).
# ----------------------------------------------------------------------------
def _tcn_kernel(x_ref, w_ref, b_ref, enc_ref, logit_ref, *,
                has_downsample, seq_len, batch):
    f32 = jnp.float32
    bf16 = jnp.bfloat16
    bt = batch * seq_len

    cur = x_ref[...]                                     # (BT, 128) f32, VMEM-resident
    bias_all = b_ref[...]                                # (B_ROWS, 128) f32, single load

    # within-sequence position of every flattened row (hoisted; reused by all blocks)
    pos = jax.lax.broadcasted_iota(jnp.int32, (bt, 1), 0) % seq_len

    w_off = 0
    b_off = 0
    # Statically unrolled: num_blocks is small here.  For deep nets / large BT,
    # switch this to lax.fori_loop or a grid axis to bound vreg live ranges.
    for i, has_ds in enumerate(has_downsample):
        d = 2 ** i                                       # dilation of this block

        w1 = w_ref[w_off           : w_off + 2 * LANE, :]   # (256,128) bf16: [tap x[t-d]; tap x[t]]
        w2 = w_ref[w_off + 2 * LANE: w_off + 4 * LANE, :]
        w_off += 4 * LANE
        b1 = bias_all[b_off     : b_off + 1, :]
        b2 = bias_all[b_off + 1 : b_off + 2, :]
        b_off += 2

        cur_b = cur.astype(bf16)                         # one activation cast per block
        keep = pos >= d                                  # (BT,1): causal mask (t >= d)

        def cconv(hf, hb, wpair, bias):
            # h[t-d] via sublane roll + mask (XLU, free-ish slot) -- no BTxBT matmul.
            hs = jnp.where(keep, pltpu.roll(hf, shift=d, axis=0), 0.0).astype(bf16)
            op = jnp.concatenate([hs, hb], axis=-1)      # (BT, 256), lane-aligned halves
            y = jnp.dot(op, wpair, preferred_element_type=f32) + bias
            return jnp.maximum(y, 0.0)                   # f32 epilogue

        h1 = cconv(cur, cur_b, w1, b1)
        h2 = cconv(h1, h1.astype(bf16), w2, b2)

        if has_ds:                                       # static per-block decision
            wd = w_ref[w_off : w_off + LANE, :]
            bd = bias_all[b_off : b_off + 1, :]
            w_off += LANE
            b_off += 1
            res = jnp.dot(cur_b, wd, preferred_element_type=f32) + bd
        else:
            res = cur                                    # exact identity residual
        cur = jnp.maximum(h2 + res, 0.0)

    # encoded = last time step of every sequence (pure slice, no selection matmul)
    enc = cur.reshape(batch, seq_len, LANE)[:, seq_len - 1, :]           # (B, 128)

    decw = w_ref[w_off : w_off + LANE, :]                # (128,128) bf16
    decb = bias_all[b_off : b_off + 1, :]
    logits = jnp.dot(enc.astype(bf16), decw, preferred_element_type=f32) + decb

    enc_ref[0] = enc
    logit_ref[0] = logits


def tcn_encode_pair(x_all, w_all, b_all, *, has_downsample, seq_len, batch):
    bt = batch * seq_len
    w_rows = w_all.shape[1]
    b_rows = b_all.shape[1]
    kern = functools.partial(_tcn_kernel, has_downsample=has_downsample,
                             seq_len=seq_len, batch=batch)
    # Explicit scoped-VMEM budget: double-buffered per-modality I/O plus headroom
    # for the (BT,256)/(BT,128) intermediates (scoped defaults: 16 MiB v5e, 32 MiB v6e+).
    per_step = (bt * LANE * 4 + w_rows * LANE * 2 + b_rows * LANE * 4
                + 2 * batch * LANE * 4)
    vmem_limit = int(min(max(4 * per_step + (4 << 20), 8 << 20), 32 << 20))
    return pl.pallas_call(
        kern,
        out_shape=(jax.ShapeDtypeStruct((2, batch, LANE), jnp.float32),   # encoded
                   jax.ShapeDtypeStruct((2, batch, LANE), jnp.float32)),  # decoder logits
        grid=(2,),                                       # one grid step per modality
        in_specs=[
            pl.BlockSpec((None, bt, LANE), lambda m: (m, 0, 0)),
            pl.BlockSpec((None, w_rows, LANE), lambda m: (m, 0, 0)),      # bf16 weight slab
            pl.BlockSpec((None, b_rows, LANE), lambda m: (m, 0, 0)),      # f32 bias slab
        ],
        out_specs=[
            pl.BlockSpec((1, batch, LANE), lambda m: (m, 0, 0)),
            pl.BlockSpec((1, batch, LANE), lambda m: (m, 0, 0)),
        ],
        compiler_params=pltpu.CompilerParams(
            dimension_semantics=("parallel",),           # modalities shard across v7x TCs
            vmem_limit_bytes=vmem_limit),
    )(x_all, w_all, b_all)


# ----------------------------------------------------------------------------
# Kernel 2: MultiModalNet head (softmax, one-hot attention, split-weight MLP).
# ----------------------------------------------------------------------------
def _head_kernel(labels_ref, logits_ref, enc_ref, mlpw_ref, mlpb_ref, out_ref, *,
                 n_classes, train):
    f32 = jnp.float32
    bf16 = jnp.bfloat16
    batch, lane = out_ref.shape

    k_enc = enc_ref[0]                                   # (B, 128) f32
    v_enc = enc_ref[1]

    if train:                                            # statically specialized
        lane_idx = jax.lax.broadcasted_iota(jnp.int32, (batch, lane), 1)
        valid = lane_idx < n_classes                     # mask padded class lanes

        def softmax(z):
            zm = jnp.where(valid, z, -1e30)
            m = jnp.max(zm, axis=1, keepdims=True)
            e = jnp.where(valid, jnp.exp(zm - m), 0.0)
            return e * pl.reciprocal(jnp.sum(e, axis=1, keepdims=True), approx=True)

        k_p = softmax(logits_ref[0])
        v_p = softmax(logits_ref[1])

        # one_hot[b, c] = (c == labels[b]) -- single broadcast compare vs (B,1) column
        one_hot = (lane_idx == labels_ref[...]).astype(f32)
        k_enc = k_enc * jnp.sum(k_p * one_hot, axis=1, keepdims=True)
        v_enc = v_enc * jnp.sum(v_p * one_hot, axis=1, keepdims=True)

    # mlp(concat([k_enc, v_enc], -1)) folded into two split-weight matmuls
    out_ref[...] = (jnp.dot(k_enc.astype(bf16), mlpw_ref[0], preferred_element_type=f32)
                    + jnp.dot(v_enc.astype(bf16), mlpw_ref[1], preferred_element_type=f32)
                    + mlpb_ref[...])


def multimodal_head(labels_col, logits_all, enc_all, mlpw_all, mlpb, *,
                    n_classes, batch, train):
    kern = functools.partial(_head_kernel, n_classes=n_classes, train=train)
    return pl.pallas_call(
        kern,
        out_shape=jax.ShapeDtypeStruct((batch, LANE), jnp.float32),
        grid=(1,),
        in_specs=[
            pl.BlockSpec((batch, 1), lambda i: (0, 0)),
            pl.BlockSpec((2, batch, LANE), lambda i: (0, 0, 0)),
            pl.BlockSpec((2, batch, LANE), lambda i: (0, 0, 0)),
            pl.BlockSpec((2, LANE, LANE), lambda i: (0, 0, 0)),
            pl.BlockSpec((1, LANE), lambda i: (0, 0)),
        ],
        out_specs=pl.BlockSpec((batch, LANE), lambda i: (0, 0)),
        compiler_params=pltpu.CompilerParams(
            dimension_semantics=("arbitrary",)),
    )(labels_col, logits_all, enc_all, mlpw_all, mlpb)


# ----------------------------------------------------------------------------
# Wrapper-side packing: pad channels to 128 lanes, pre-cast weights to bf16.
# ----------------------------------------------------------------------------
def _pad_to(a, shape):
    return jnp.pad(a, [(0, s - d) for d, s in zip(a.shape, shape)])


def _pack_tcn(p):
    """Pack one modality's TCN params into a bf16 weight slab + f32 bias slab."""
    wrows, brows, has_ds = [], [], []
    for blk in p["blocks"]:
        # both conv taps packed into one (256,128) weight -> single K=256 MXU matmul
        wrows.append(jnp.concatenate([_pad_to(blk["w1"][0], (LANE, LANE)),   # tap x[t-d]
                                      _pad_to(blk["w1"][1], (LANE, LANE))], 0))  # tap x[t]
        wrows.append(jnp.concatenate([_pad_to(blk["w2"][0], (LANE, LANE)),
                                      _pad_to(blk["w2"][1], (LANE, LANE))], 0))
        brows += [_pad_to(blk["b1"][None, :], (1, LANE)),
                  _pad_to(blk["b2"][None, :], (1, LANE))]
        if blk["wd"] is not None:
            wrows.append(_pad_to(blk["wd"], (LANE, LANE)))
            brows.append(_pad_to(blk["bd"][None, :], (1, LANE)))
            has_ds.append(True)
        else:
            has_ds.append(False)
    wrows.append(_pad_to(p["dec_w"], (LANE, LANE)))
    brows.append(_pad_to(p["dec_b"][None, :], (1, LANE)))
    wslab = jnp.concatenate(wrows, axis=0).astype(jnp.bfloat16)  # host-side bf16 cast
    bslab = jnp.concatenate(brows, axis=0)                       # f32
    return wslab, bslab, tuple(has_ds)


def multi_modal_net_forward(params, k_input, v_input, labels, task):
    bsz, seq_len, _ = k_input.shape
    n_classes = params["mlp_b"].shape[0]

    kw, kb, k_ds = _pack_tcn(params["k_model"])
    vw, vb, v_ds = _pack_tcn(params["v_model"])
    # TODO(synk): stacked-modality kernel assumes both TCNs share depth and the
    # same downsample pattern (true for this config); otherwise split the call.
    assert k_ds == v_ds and kw.shape == vw.shape, "k/v TCN structures must match"

    bt = bsz * seq_len
    x_all = jnp.stack(
        [_pad_to(k_input.reshape(bt, -1), (bt, LANE)),
         _pad_to(v_input.reshape(bt, -1), (bt, LANE))], 0)
    w_all = jnp.stack([kw, vw], 0)                       # (2, W_ROWS, 128) bf16
    b_all = jnp.stack([kb, vb], 0)                       # (2, B_ROWS, 128) f32

    enc_all, logits_all = tcn_encode_pair(
        x_all, w_all, b_all, has_downsample=k_ds, seq_len=seq_len, batch=bsz)

    ck = params["k_model"]["dec_w"].shape[0]             # k_channels[-1]
    mlpw_all = jnp.stack([_pad_to(params["mlp_w"][:ck], (LANE, LANE)),
                          _pad_to(params["mlp_w"][ck:], (LANE, LANE))],
                         0).astype(jnp.bfloat16)         # host-side bf16 cast
    mlpb = _pad_to(params["mlp_b"][None, :], (1, LANE))

    labels_col = labels.reshape(bsz, 1).astype(jnp.int32)
    out_pad = multimodal_head(labels_col, logits_all, enc_all, mlpw_all, mlpb,
                              n_classes=n_classes, batch=bsz,
                              train=(task == "train"))
    out = out_pad[:, :n_classes]
    k_out = logits_all[0, :, :n_classes]
    v_out = logits_all[1, :, :n_classes]
    return out, k_out, v_out


# ----------------------------------------------------------------------------
# Deterministic parameter init (logical / unpadded, packed at call time)
# ----------------------------------------------------------------------------
def _init_tcanet(key, in_dim, channels, n_classes, kernel_size=2):
    assert kernel_size == 2, "kernel packs exactly two conv taps per block"
    blocks = []
    for i, cout in enumerate(channels):
        cin = in_dim if i == 0 else channels[i - 1]
        key, k1, k2, k3 = jax.random.split(key, 4)
        blocks.append({
            "w1": jax.random.normal(k1, (kernel_size, cin, cout), jnp.float32) * 0.1,
            "b1": jnp.zeros((cout,), jnp.float32),
            "w2": jax.random.normal(k2, (kernel_size, cout, cout), jnp.float32) * 0.1,
            "b2": jnp.zeros((cout,), jnp.float32),
            "wd": (jax.random.normal(k3, (cin, cout), jnp.float32) * 0.1
                   if cin != cout else None),
            "bd": jnp.zeros((cout,), jnp.float32) if cin != cout else None,
        })
    key, kd = jax.random.split(key)
    return {
        "blocks": blocks,
        "dec_w": jax.random.normal(kd, (channels[-1], n_classes), jnp.float32) * 0.1,
        "dec_b": jnp.zeros((n_classes,), jnp.float32),
    }


def init_params(key, emb_size, visual_emsize, k_channels, v_channels, n_classes):
    kk, kv, km = jax.random.split(key, 3)
    return {
        "k_model": _init_tcanet(kk, emb_size, k_channels, n_classes),
        "v_model": _init_tcanet(kv, visual_emsize, v_channels, n_classes),
        "mlp_w": jax.random.normal(
            km, (k_channels[-1] + v_channels[-1], n_classes), jnp.float32) * 0.1,
        "mlp_b": jnp.zeros((n_classes,), jnp.float32),
    }


if __name__ == "__main__":
    B, T = 2, 8
    emb_size = 16            # kinematic feature dim
    visual_emsize = 32       # visual feature dim
    k_channels = [24, 24]    # block0: downsample (16->24), block1: identity
    v_channels = [48, 48]    # block0: downsample (32->48), block1: identity
    n_classes = 10           # input_output_size

    root = jax.random.PRNGKey(0)
    kp, kx, kv, kl = jax.random.split(root, 4)

    params = init_params(kp, emb_size, visual_emsize, k_channels, v_channels,
                         n_classes)
    k_input = jax.random.normal(kx, (B, T, emb_size), jnp.float32)
    v_input = jax.random.normal(kv, (B, T, visual_emsize), jnp.float32)
    labels = jax.random.randint(kl, (B,), 0, n_classes, jnp.int32)

    out, k_outbatch, v_outbatch = multi_modal_net_forward(
        params, k_input, v_input, labels, task="train")

    jax.block_until_ready((out, k_outbatch, v_outbatch))
    assert out.shape == (B, n_classes)
    assert k_outbatch.shape == (B, n_classes)
    assert v_outbatch.shape == (B, n_classes)
    assert bool(jnp.all(jnp.isfinite(out)))
    print("KERNEL_OK")
</pallas_src>

<mosaic_0001>
module attributes {stable_mosaic.version = 11 : i64} {
  func.func @_tcn_kernel(%arg0: i32, %arg1: memref<1x16x128xf32, #tpu.memory_space<vmem>>, %arg2: memref<1x1280x128xbf16, #tpu.memory_space<vmem>>, %arg3: memref<1x6x128xf32, #tpu.memory_space<vmem>>, %arg4: memref<1x2x128xf32, #tpu.memory_space<vmem>>, %arg5: memref<1x2x128xf32, #tpu.memory_space<vmem>>) attributes {dimension_semantics = [#tpu.dimension_semantics<parallel>], iteration_bounds = array<i64: 2>, scalar_prefetch = 0 : i64, scratch_operands = 0 : i64, tpu.core_type = #tpu.core_type<tc>, window_params = [{transform_indices = @transform_0, window_bounds = array<i64: 1, 16, 128>}, {transform_indices = @transform_1, window_bounds = array<i64: 1, 1280, 128>}, {transform_indices = @transform_2, window_bounds = array<i64: 1, 6, 128>}, {transform_indices = @transform_3, window_bounds = array<i64: 1, 2, 128>}, {transform_indices = @transform_4, window_bounds = array<i64: 1, 2, 128>}]} {
    %c0 = arith.constant 0 : index
    %c0_0 = arith.constant 0 : index
    %c0_1 = arith.constant 0 : index
    %0 = vector.load %arg1[%c0, %c0_0, %c0_1] : memref<1x16x128xf32, #tpu.memory_space<vmem>>, vector<1x16x128xf32>
    %1 = vector.shape_cast %0 : vector<1x16x128xf32> to vector<16x128xf32>
    %c0_2 = arith.constant 0 : index
    %c0_3 = arith.constant 0 : index
    %c0_4 = arith.constant 0 : index
    %2 = vector.load %arg3[%c0_2, %c0_3, %c0_4] : memref<1x6x128xf32, #tpu.memory_space<vmem>>, vector<1x6x128xf32>
    %3 = vector.shape_cast %2 : vector<1x6x128xf32> to vector<6x128xf32>
    %4 = tpu.iota {dimensions = array<i32: 0>} : vector<16x1xi32>
    %c8_i32 = arith.constant 8 : i32
    %c0_i32 = arith.constant 0 : i32
    %5 = arith.cmpi eq, %c8_i32, %c0_i32 : i32
    %c1_i32 = arith.constant 1 : i32
    %6 = arith.select %5, %c1_i32, %c8_i32 : i32
    %7 = vector.broadcast %6 : i32 to vector<16x1xi32>
    %8 = arith.remsi %4, %7 : vector<16x1xi32>
    %c0_i32_5 = arith.constant 0 : i32
    %9 = vector.broadcast %c0_i32_5 : i32 to vector<16x1xi32>
    %10 = arith.cmpi ne, %8, %9 : vector<16x1xi32>
    %c0_i32_6 = arith.constant 0 : i32
    %11 = vector.broadcast %c0_i32_6 : i32 to vector<16x1xi32>
    %12 = arith.cmpi slt, %8, %11 : vector<16x1xi32>
    %c0_i32_7 = arith.constant 0 : i32
    %13 = arith.cmpi slt, %6, %c0_i32_7 : i32
    %14 = vector.broadcast %13 : i1 to vector<16x1xi1>
    %15 = vector.broadcast %14 : vector<16x1xi1> to vector<16x1xi1>
    %16 = arith.xori %12, %15 : vector<16x1xi1>
    %17 = arith.andi %16, %10 : vector<16x1xi1>
    %18 = vector.broadcast %6 : i32 to vector<16x1xi32>
    %19 = arith.addi %8, %18 : vector<16x1xi32>
    %20 = arith.select %17, %19, %8 : vector<16x1xi1>, vector<16x1xi32>
    %c0_8 = arith.constant 0 : index
    %c0_9 = arith.constant 0 : index
    %c0_10 = arith.constant 0 : index
    %21 = vector.load %arg2[%c0_8, %c0_9, %c0_10] : memref<1x1280x128xbf16, #tpu.memory_space<vmem>>, vector<1x256x128xbf16>
    %22 = vector.shape_cast %21 : vector<1x256x128xbf16> to vector<256x128xbf16>
    %c0_11 = arith.constant 0 : index
    %c256 = arith.constant 256 : index
    %c0_12 = arith.constant 0 : index
    %23 = vector.load %arg2[%c0_11, %c256, %c0_12] : memref<1x1280x128xbf16, #tpu.memory_space<vmem>>, vector<1x256x128xbf16>
    %24 = vector.shape_cast %23 : vector<1x256x128xbf16> to vector<256x128xbf16>
    %25 = vector.extract_strided_slice %3 {offsets = [0, 0], sizes = [1, 128], strides = [1, 1]} : vector<6x128xf32> to vector<1x128xf32>
    %26 = vector.extract_strided_slice %3 {offsets = [1, 0], sizes = [1, 128], strides = [1, 1]} : vector<6x128xf32> to vector<1x128xf32>
    %27 = arith.truncf %1 : vector<16x128xf32> to vector<16x128xbf16>
    %c1_i32_13 = arith.constant 1 : i32
    %28 = vector.broadcast %c1_i32_13 : i32 to vector<16x1xi32>
    %29 = arith.cmpi sge, %20, %28 : vector<16x1xi32>
    %c1_i32_14 = arith.constant 1 : i32
    %30 = tpu.dynamic_rotate %1 by %c1_i32_14 dim 0 : vector<16x128xf32>, i32 -> vector<16x128xf32>
    %cst = arith.constant 0.000000e+00 : f32
    %31 = vector.shape_cast %29 : vector<16x1xi1> to vector<16x1xi1>
    %32 = vector.broadcast %31 : vector<16x1xi1> to vector<16x128xi1>
    %33 = vector.broadcast %cst : f32 to vector<16x128xf32>
    %34 = arith.select %32, %30, %33 : vector<16x128xi1>, vector<16x128xf32>
    %35 = arith.truncf %34 : vector<16x128xf32> to vector<16x128xbf16>
    %36 = tpu.concatenate %35, %27 in 1 : vector<16x128xbf16>, vector<16x128xbf16> -> vector<16x256xbf16>
    %cst_15 = arith.constant dense<0.000000e+00> : vector<16x128xf32>
    %37 = tpu.matmul %36, %22, %cst_15 {dimension_numbers = #tpu.dot_dimension_numbers<[1], [0], [0], [1], [0, 0, 1, 1], [], []>} : vector<16x256xbf16>, vector<256x128xbf16>, vector<16x128xf32> -> vector<16x128xf32>
    %38 = vector.broadcast %25 : vector<1x128xf32> to vector<16x128xf32>
    %39 = arith.addf %37, %38 : vector<16x128xf32>
    %cst_16 = arith.constant 0.000000e+00 : f32
    %40 = vector.broadcast %cst_16 : f32 to vector<16x128xf32>
    %41 = arith.maximumf %39, %40 : vector<16x128xf32>
    %42 = arith.truncf %41 : vector<16x128xf32> to vector<16x128xbf16>
    %c1_i32_17 = arith.constant 1 : i32
    %43 = tpu.dynamic_rotate %41 by %c1_i32_17 dim 0 : vector<16x128xf32>, i32 -> vector<16x128xf32>
    %cst_18 = arith.constant 0.000000e+00 : f32
    %44 = vector.shape_cast %29 : vector<16x1xi1> to vector<16x1xi1>
    %45 = vector.broadcast %44 : vector<16x1xi1> to vector<16x128xi1>
    %46 = vector.broadcast %cst_18 : f32 to vector<16x128xf32>
    %47 = arith.select %45, %43, %46 : vector<16x128xi1>, vector<16x128xf32>
    %48 = arith.truncf %47 : vector<16x128xf32> to vector<16x128xbf16>
    %49 = tpu.concatenate %48, %42 in 1 : vector<16x128xbf16>, vector<16x128xbf16> -> vector<16x256xbf16>
    %cst_19 = arith.constant dense<0.000000e+00> : vector<16x128xf32>
    %50 = tpu.matmul %49, %24, %cst_19 {dimension_numbers = #tpu.dot_dimension_numbers<[1], [0], [0], [1], [0, 0, 1, 1], [], []>} : vector<16x256xbf16>, vector<256x128xbf16>, vector<16x128xf32> -> vector<16x128xf32>
    %51 = vector.broadcast %26 : vector<1x128xf32> to vector<16x128xf32>
    %52 = arith.addf %50, %51 : vector<16x128xf32>
    %cst_20 = arith.constant 0.000000e+00 : f32
    %53 = vector.broadcast %cst_20 : f32 to vector<16x128xf32>
    %54 = arith.maximumf %52, %53 : vector<16x128xf32>
    %c0_21 = arith.constant 0 : index
    %c512 = arith.constant 512 : index
    %c0_22 = arith.constant 0 : index
    %55 = vector.load %arg2[%c0_21, %c512, %c0_22] : memref<1x1280x128xbf16, #tpu.memory_space<vmem>>, vector<1x128x128xbf16>
    %56 = vector.shape_cast %55 : vector<1x128x128xbf16> to vector<128x128xbf16>
    %57 = vector.extract_strided_slice %3 {offsets = [2, 0], sizes = [1, 128], strides = [1, 1]} : vector<6x128xf32> to vector<1x128xf32>
    %cst_23 = arith.constant dense<0.000000e+00> : vector<16x128xf32>
    %58 = tpu.matmul %27, %56, %cst_23 {dimension_numbers = #tpu.dot_dimension_numbers<[1], [0], [0], [1], [0, 0, 1, 1], [], []>} : vector<16x128xbf16>, vector<128x128xbf16>, vector<16x128xf32> -> vector<16x128xf32>
    %59 = vector.broadcast %57 : vector<1x128xf32> to vector<16x128xf32>
    %60 = arith.addf %58, %59 : vector<16x128xf32>
    %61 = arith.addf %54, %60 : vector<16x128xf32>
    %cst_24 = arith.constant 0.000000e+00 : f32
    %62 = vector.broadcast %cst_24 : f32 to vector<16x128xf32>
    %63 = arith.maximumf %61, %62 : vector<16x128xf32>
    %c0_25 = arith.constant 0 : index
    %c640 = arith.constant 640 : index
    %c0_26 = arith.constant 0 : index
    %64 = vector.load %arg2[%c0_25, %c640, %c0_26] : memref<1x1280x128xbf16, #tpu.memory_space<vmem>>, vector<1x256x128xbf16>
    %65 = vector.shape_cast %64 : vector<1x256x128xbf16> to vector<256x128xbf16>
    %c0_27 = arith.constant 0 : index
    %c896 = arith.constant 896 : index
    %c0_28 = arith.constant 0 : index
    %66 = vector.load %arg2[%c0_27, %c896, %c0_28] : memref<1x1280x128xbf16, #tpu.memory_space<vmem>>, vector<1x256x128xbf16>
    %67 = vector.shape_cast %66 : vector<1x256x128xbf16> to vector<256x128xbf16>
    %68 = vector.extract_strided_slice %3 {offsets = [3, 0], sizes = [1, 128], strides = [1, 1]} : vector<6x128xf32> to vector<1x128xf32>
    %69 = vector.extract_strided_slice %3 {offsets = [4, 0], sizes = [1, 128], strides = [1, 1]} : vector<6x128xf32> to vector<1x128xf32>
    %70 = arith.truncf %63 : vector<16x128xf32> to vector<16x128xbf16>
    %c2_i32 = arith.constant 2 : i32
    %71 = vector.broadcast %c2_i32 : i32 to vector<16x1xi32>
    %72 = arith.cmpi sge, %20, %71 : vector<16x1xi32>
    %c2_i32_29 = arith.constant 2 : i32
    %73 = tpu.dynamic_rotate %63 by %c2_i32_29 dim 0 : vector<16x128xf32>, i32 -> vector<16x128xf32>
    %cst_30 = arith.constant 0.000000e+00 : f32
    %74 = vector.shape_cast %72 : vector<16x1xi1> to vector<16x1xi1>
    %75 = vector.broadcast %74 : vector<16x1xi1> to vector<16x128xi1>
    %76 = vector.broadcast %cst_30 : f32 to vector<16x128xf32>
    %77 = arith.select %75, %73, %76 : vector<16x128xi1>, vector<16x128xf32>
    %78 = arith.truncf %77 : vector<16x128xf32> to vector<16x128xbf16>
    %79 = tpu.concatenate %78, %70 in 1 : vector<16x128xbf16>, vector<16x128xbf16> -> vector<16x256xbf16>
    %cst_31 = arith.constant dense<0.000000e+00> : vector<16x128xf32>
    %80 = tpu.matmul %79, %65, %cst_31 {dimension_numbers = #tpu.dot_dimension_numbers<[1], [0], [0], [1], [0, 0, 1, 1], [], []>} : vector<16x256xbf16>, vector<256x128xbf16>, vector<16x128xf32> -> vector<16x128xf32>
    %81 = vector.broadcast %68 : vector<1x128xf32> to vector<16x128xf32>
    %82 = arith.addf %80, %81 : vector<16x128xf32>
    %cst_32 = arith.constant 0.000000e+00 : f32
    %83 = vector.broadcast %cst_32 : f32 to vector<16x128xf32>
    %84 = arith.maximumf %82, %83 : vector<16x128xf32>
    %85 = arith.truncf %84 : vector<16x128xf32> to vector<16x128xbf16>
    %c2_i32_33 = arith.constant 2 : i32
    %86 = tpu.dynamic_rotate %84 by %c2_i32_33 dim 0 : vector<16x128xf32>, i32 -> vector<16x128xf32>
    %cst_34 = arith.constant 0.000000e+00 : f32
    %87 = vector.shape_cast %72 : vector<16x1xi1> to vector<16x1xi1>
    %88 = vector.broadcast %87 : vector<16x1xi1> to vector<16x128xi1>
    %89 = vector.broadcast %cst_34 : f32 to vector<16x128xf32>
    %90 = arith.select %88, %86, %89 : vector<16x128xi1>, vector<16x128xf32>
    %91 = arith.truncf %90 : vector<16x128xf32> to vector<16x128xbf16>
    %92 = tpu.concatenate %91, %85 in 1 : vector<16x128xbf16>, vector<16x128xbf16> -> vector<16x256xbf16>
    %cst_35 = arith.constant dense<0.000000e+00> : vector<16x128xf32>
    %93 = tpu.matmul %92, %67, %cst_35 {dimension_numbers = #tpu.dot_dimension_numbers<[1], [0], [0], [1], [0, 0, 1, 1], [], []>} : vector<16x256xbf16>, vector<256x128xbf16>, vector<16x128xf32> -> vector<16x128xf32>
    %94 = vector.broadcast %69 : vector<1x128xf32> to vector<16x128xf32>
    %95 = arith.addf %93, %94 : vector<16x128xf32>
    %cst_36 = arith.constant 0.000000e+00 : f32
    %96 = vector.broadcast %cst_36 : f32 to vector<16x128xf32>
    %97 = arith.maximumf %95, %96 : vector<16x128xf32>
    %98 = arith.addf %97, %63 : vector<16x128xf32>
    %cst_37 = arith.constant 0.000000e+00 : f32
    %99 = vector.broadcast %cst_37 : f32 to vector<16x128xf32>
    %100 = arith.maximumf %98, %99 : vector<16x128xf32>
    %101 = vector.shape_cast %100 : vector<16x128xf32> to vector<2x8x128xf32>
    %102 = vector.extract_strided_slice %101 {offsets = [0, 7, 0], sizes = [2, 1, 128], strides = [1, 1, 1]} : vector<2x8x128xf32> to vector<2x1x128xf32>
    %103 = vector.shape_cast %102 : vector<2x1x128xf32> to vector<2x128xf32>
    %c0_38 = arith.constant 0 : index
    %c1152 = arith.constant 1152 : index
    %c0_39 = arith.constant 0 : index
    %104 = vector.load %arg2[%c0_38, %c1152, %c0_39] : memref<1x1280x128xbf16, #tpu.memory_space<vmem>>, vector<1x128x128xbf16>
    %105 = vector.shape_cast %104 : vector<1x128x128xbf16> to vector<128x128xbf16>
    %106 = vector.extract_strided_slice %3 {offsets = [5, 0], sizes = [1, 128], strides = [1, 1]} : vector<6x128xf32> to vector<1x128xf32>
    %107 = arith.truncf %103 : vector<2x128xf32> to vector<2x128xbf16>
    %cst_40 = arith.constant dense<0.000000e+00> : vector<2x128xf32>
    %108 = tpu.matmul %107, %105, %cst_40 {dimension_numbers = #tpu.dot_dimension_numbers<[1], [0], [0], [1], [0, 0, 1, 1], [], []>} : vector<2x128xbf16>, vector<128x128xbf16>, vector<2x128xf32> -> vector<2x128xf32>
    %109 = vector.broadcast %106 : vector<1x128xf32> to vector<2x128xf32>
    %110 = arith.addf %108, %109 : vector<2x128xf32>
    %c0_41 = arith.constant 0 : index
    %c0_42 = arith.constant 0 : index
    %c0_43 = arith.constant 0 : index
    %111 = vector.load %arg4[%c0_41, %c0_42, %c0_43] : memref<1x2x128xf32, #tpu.memory_space<vmem>>, vector<1x2x128xf32>
    %112 = vector.shape_cast %111 : vector<1x2x128xf32> to vector<2x128xf32>
    %113 = vector.shape_cast %103 : vector<2x128xf32> to vector<1x2x128xf32>
    tpu.vector_store %arg4[%c0_41, %c0_42, %c0_43], %113 {strides = array<i32>} : memref<1x2x128xf32, #tpu.memory_space<vmem>>, vector<1x2x128xf32>,
    %c0_44 = arith.constant 0 : index
    %c0_45 = arith.constant 0 : index
    %c0_46 = arith.constant 0 : index
    %114 = vector.load %arg5[%c0_44, %c0_45, %c0_46] : memref<1x2x128xf32, #tpu.memory_space<vmem>>, vector<1x2x128xf32>
    %115 = vector.shape_cast %114 : vector<1x2x128xf32> to vector<2x128xf32>
    %116 = vector.shape_cast %110 : vector<2x128xf32> to vector<1x2x128xf32>
    tpu.vector_store %arg5[%c0_44, %c0_45, %c0_46], %116 {strides = array<i32>} : memref<1x2x128xf32, #tpu.memory_space<vmem>>, vector<1x2x128xf32>,
    return
  }
  func.func @transform_0(%arg0: i32) -> (i32, i32, i32) {
    %c0_i32 = arith.constant 0 : i32
    %c0_i32_0 = arith.constant 0 : i32
    %c0_i32_1 = arith.constant 0 : i32
    return %arg0, %c0_i32, %c0_i32_0 : i32, i32, i32
  }
  func.func @transform_1(%arg0: i32) -> (i32, i32, i32) {
    %c0_i32 = arith.constant 0 : i32
    %c0_i32_0 = arith.constant 0 : i32
    %c0_i32_1 = arith.constant 0 : i32
    return %arg0, %c0_i32, %c0_i32_0 : i32, i32, i32
  }
  func.func @transform_2(%arg0: i32) -> (i32, i32, i32) {
    %c0_i32 = arith.constant 0 : i32
    %c0_i32_0 = arith.constant 0 : i32
    %c0_i32_1 = arith.constant 0 : i32
    return %arg0, %c0_i32, %c0_i32_0 : i32, i32, i32
  }
  func.func @transform_3(%arg0: i32) -> (i32, i32, i32) {
    %c0_i32 = arith.constant 0 : i32
    %c0_i32_0 = arith.constant 0 : i32
    %c0_i32_1 = arith.constant 0 : i32
    return %arg0, %c0_i32, %c0_i32_0 : i32, i32, i32
  }
  func.func @transform_4(%arg0: i32) -> (i32, i32, i32) {
    %c0_i32 = arith.constant 0 : i32
    %c0_i32_0 = arith.constant 0 : i32
    %c0_i32_1 = arith.constant 0 : i32
    return %arg0, %c0_i32, %c0_i32_0 : i32, i32, i32
  }
}

</mosaic_0001>

<llo_original>
// kernel: tpu_custom_call.1
$region0: #{tpu_custom_call.1}
  #allocation0 [shape = 'u32[]', space=smem, size = 0x4, offset = 0x4, fixed_abs, tag = 'smem constant byte address 0x4 - core index']
  #allocation1 [shape = 'u32[144,128]{1,0:T(1,128)}', space=vmem, size = 0x12000, scoped, tag = 'internal scratch']
  %s0 = inlined_call_operand.hbm [shape: f32[2,16,128], index: 0, kind: input, shape index: {}]
  %s1 = inlined_call_operand.hbm [shape: bf16[2,1280,128], index: 1, kind: input, shape index: {}]
  %s2 = inlined_call_operand.vmem [shape: f32[2,6,128], index: 2, kind: input, shape index: {}]
  %s3 = inlined_call_operand.hbm [shape: f32[2,2,128], index: 3, kind: output, shape index: {0}]
  %s4 = inlined_call_operand.hbm [shape: f32[2,2,128], index: 4, kind: output, shape index: {1}]
  %5 = xla_tuple %s3, %s4
  %s6 = sld [smem:[#allocation0]]
  $region61: #{tpu_custom_call.1} parent=0
    _
  %s8 = ssub.s32 1, %s6
  %s9 = scalar_select 0, %s8, %s6
  $region1: #{tpu_custom_call.1} parent=0
    #allocation2 [shape = 'u8[16384]{0}', space=vmem, size = 0x4000, scoped, tag = 'input window, operand 0']
    #allocation3 [shape = 's32[2]{0}', space=sflag, size = 0x8, scoped, tag = 'scoped memory for tpu_custom_call.1']
    #allocation4 [shape = 's32[2]{0}', space=sflag, size = 0x8, scoped, tag = 'scoped memory for tpu_custom_call.1']
    #allocation5 [shape = 'u8[655360]{0}', space=vmem, size = 0xa0000, scoped, tag = 'input window, operand 1']
    #allocation6 [shape = 's32[2]{0}', space=sflag, size = 0x8, scoped, tag = 'scoped memory for tpu_custom_call.1']
    #allocation7 [shape = 'u8[2048]{0}', space=vmem, size = 0x800, scoped, tag = 'output window, operand 0']
    #allocation8 [shape = 'u8[2048]{0}', space=vmem, size = 0x800, scoped, tag = 'output window, operand 1']
    #allocation9 [shape = 's32[2]{0}', space=sflag, size = 0x8, scoped, tag = 'scoped memory for tpu_custom_call.1']
    %10 = vsyncpa [#allocation3], 0
    %s11 = scalar_lea.sflag [#allocation3], 1
    %12 = vsyncpa %s11, 0
    %13 = vsyncpa [#allocation6], 0
    %s14 = scalar_lea.sflag [#allocation6], 1
    %15 = vsyncpa %s14, 0
    %16 = vsyncpa [#allocation4], 0
    %s17 = scalar_lea.sflag [#allocation4], 1
    %18 = vsyncpa %s17, 0
    %19 = vsyncpa [#allocation9], 0
    %s20 = scalar_lea.sflag [#allocation9], 1
    %21 = vsyncpa %s20, 0
    loop: start=0, step=1, limit=4
    $region2: #{tpu_custom_call.1} parent=1 // loop_pre_header
      _
    $region3: #{tpu_custom_call.1} parent=1 // loop_header
      %s23 = sphi 0, %s27
      %p24 = scmp.ge.s32.totalorder %s23, 4
      %s33 = sphi 0, %s35
      %s36 = sphi 0, %s33
      %s37 = sphi 0, %s36
      %s53 = sphi 0, %s37
      %s59 = sphi 0, %s61
      %s62 = sphi 0, %s59
      %s63 = sphi 0, %s62
      %s79 = sphi 0, %s63
      %s85 = sphi 0, %s87
      %s88 = sphi 0, %s85
      %s89 = sphi 0, %s88
      %s105 = sphi 0, %s89
      %s111 = sphi 0, %s113
      %s114 = sphi 0, %s111
      %s115 = sphi 0, %s114
      %s131 = sphi 0, %s115
      %s137 = sphi 0, %s139
      %s140 = sphi 0, %s137
      %s141 = sphi 0, %s140
      %s157 = sphi 0, %s141
    $region4: #{tpu_custom_call.1} parent=1 // loop_header_branch
      %26 = sbr.rel (%p24) target = $region8
    $region5: #{tpu_custom_call.1} parent=1 // loop_body
      %s28 = ssub.s32 %s23, 1
      %s29 = ssub.s32 %s23, 2
      %s30 = sadd.s32 %s23, 1
      %s31 = ssub.s32 %s23, %s30
      %p32 = scmp.eq.s32.totalorder %s31, 0
      %s34 = sadd.s32 %s33, 1
      %s35 = scalar_select %p32, %s33, %s34
      %p38 = pneg %p32
      %p39 = scmp.eq.s32.totalorder %s23, 1
      %p40 = por %p38, %p39
      %p41 = scmp.ne.s32.totalorder %s33, %s36
      %p42 = scmp.eq.s32.totalorder %s23, 0
      %p43 = por %p41, %p42
      %p44 = scmp.ne.s32.totalorder %s33, %s36
      %p45 = scmp.eq.s32.totalorder %s28, 1
      %p46 = por %p44, %p45
      %p47 = scmp.ne.s32.totalorder %s36, %s37
      %p48 = scmp.eq.s32.totalorder %s28, 0
      %p49 = por %p47, %p48
      %p50 = scmp.ne.s32.totalorder %s36, %s37
      %p51 = scmp.eq.s32.totalorder %s29, 1
      %p52 = por %p50, %p51
      %p54 = scmp.ne.s32.totalorder %s37, %s53
      %p55 = scmp.eq.s32.totalorder %s29, 0
      %p56 = por %p54, %p55
      %s57 = ssub.s32 %s23, %s30
      %p58 = scmp.eq.s32.totalorder %s57, 0
      %s60 = sadd.s32 %s59, 1
      %s61 = scalar_select %p58, %s59, %s60
      %p64 = pneg %p58
      %p65 = scmp.eq.s32.totalorder %s23, 1
      %p66 = por %p64, %p65
      %p67 = scmp.ne.s32.totalorder %s59, %s62
      %p68 = scmp.eq.s32.totalorder %s23, 0
      %p69 = por %p67, %p68
      %p70 = scmp.ne.s32.totalorder %s59, %s62
      %p71 = scmp.eq.s32.totalorder %s28, 1
      %p72 = por %p70, %p71
      %p73 = scmp.ne.s32.totalorder %s62, %s63
      %p74 = scmp.eq.s32.totalorder %s28, 0
      %p75 = por %p73, %p74
      %p76 = scmp.ne.s32.totalorder %s62, %s63
      %p77 = scmp.eq.s32.totalorder %s29, 1
      %p78 = por %p76, %p77
      %p80 = scmp.ne.s32.totalorder %s63, %s79
      %p81 = scmp.eq.s32.totalorder %s29, 0
      %p82 = por %p80, %p81
      %s83 = ssub.s32 %s23, %s30
      %p84 = scmp.eq.s32.totalorder %s83, 0
      %s86 = sadd.s32 %s85, 1
      %s87 = scalar_select %p84, %s85, %s86
      %p90 = pneg %p84
      %p91 = scmp.eq.s32.totalorder %s23, 1
      %p92 = por %p90, %p91
      %p93 = scmp.ne.s32.totalorder %s85, %s88
      %p94 = scmp.eq.s32.totalorder %s23, 0
      %p95 = por %p93, %p94
      %p96 = scmp.ne.s32.totalorder %s85, %s88
      %p97 = scmp.eq.s32.totalorder %s28, 1
      %p98 = por %p96, %p97
      %p99 = scmp.ne.s32.totalorder %s88, %s89
      %p100 = scmp.eq.s32.totalorder %s28, 0
      %p101 = por %p99, %p100
      %p102 = scmp.ne.s32.totalorder %s88, %s89
      %p103 = scmp.eq.s32.totalorder %s29, 1
      %p104 = por %p102, %p103
      %p106 = scmp.ne.s32.totalorder %s89, %s105
      %p107 = scmp.eq.s32.totalorder %s29, 0
      %p108 = por %p106, %p107
      %s109 = ssub.s32 %s23, %s30
      %p110 = scmp.eq.s32.totalorder %s109, 0
      %s112 = sadd.s32 %s111, 1
      %s113 = scalar_select %p110, %s111, %s112
      %p116 = pneg %p110
      %p117 = scmp.eq.s32.totalorder %s23, 1
      %p118 = por %p116, %p117
      %p119 = scmp.ne.s32.totalorder %s111, %s114
      %p120 = scmp.eq.s32.totalorder %s23, 0
      %p121 = por %p119, %p120
      %p122 = scmp.ne.s32.totalorder %s111, %s114
      %p123 = scmp.eq.s32.totalorder %s28, 1
      %p124 = por %p122, %p123
      %p125 = scmp.ne.s32.totalorder %s114, %s115
      %p126 = scmp.eq.s32.totalorder %s28, 0
      %p127 = por %p125, %p126
      %p128 = scmp.ne.s32.totalorder %s114, %s115
      %p129 = scmp.eq.s32.totalorder %s29, 1
      %p130 = por %p128, %p129
      %p132 = scmp.ne.s32.totalorder %s115, %s131
      %p133 = scmp.eq.s32.totalorder %s29, 0
      %p134 = por %p132, %p133
      %s135 = ssub.s32 %s23, %s30
      %p136 = scmp.eq.s32.totalorder %s135, 0
      %s138 = sadd.s32 %s137, 1
      %s139 = scalar_select %p136, %s137, %s138
      %p142 = pneg %p136
      %p143 = scmp.eq.s32.totalorder %s23, 1
      %p144 = por %p142, %p143
      %p145 = scmp.ne.s32.totalorder %s137, %s140
      %p146 = scmp.eq.s32.totalorder %s23, 0
      %p147 = por %p145, %p146
      %p148 = scmp.ne.s32.totalorder %s137, %s140
      %p149 = scmp.eq.s32.totalorder %s28, 1
      %p150 = por %p148, %p149
      %p151 = scmp.ne.s32.totalorder %s140, %s141
      %p152 = scmp.eq.s32.totalorder %s28, 0
      %p153 = por %p151, %p152
      %p154 = scmp.ne.s32.totalorder %s140, %s141
      %p155 = scmp.eq.s32.totalorder %s29, 1
      %p156 = por %p154, %p155
      %p158 = scmp.ne.s32.totalorder %s141, %s157
      %p159 = scmp.eq.s32.totalorder %s29, 0
      %p160 = por %p158, %p159
      %p161 = scmp.le.s32.totalorder 1, %s23
      %p162 = scmp.lt.s32.totalorder %s23, 3
      %p163 = pnand %p161, %p162
      %p164 = pneg %p163
      // Predicated region
      $region9: #{tpu_custom_call.1} parent=5 // pred_check
        _
      $region10: #{tpu_custom_call.1} parent=5 // pred_check_branch
        %166 = sbr.rel (%p163) target = $region12
      $region11: #{tpu_custom_call.1} parent=5 // pred_region
        %s167 = ssub.s32 %s23, 1
      $region12: #{tpu_custom_call.1} parent=5 // pred_fallthru
        _
      %p168 = scmp.lt.s32.totalorder %s23, 2
      // Predicated region
      $region13: #{tpu_custom_call.1} parent=5 // pred_check
        %p169 = pneg %p168
      $region14: #{tpu_custom_call.1} parent=5 // pred_check_branch
        %171 = sbr.rel (%p169) target = $region16
      $region15: #{tpu_custom_call.1} parent=5 // pred_region
        // Predicated region
        $region17: #{tpu_custom_call.1} parent=15 // pred_check
          %p172 = pneg %p43
        $region18: #{tpu_custom_call.1} parent=15 // pred_check_branch
          %174 = sbr.rel (%p172) target = $region20
        $region19: #{tpu_custom_call.1} parent=15 // pred_region
          %s175 = sand.u32 %s33, 1
          %s176 = scalar_lea.sflag [#allocation3], %s175
          %s177 = sand.u32 %s33, 1
          %s178 = smul.addr %s177, 16
          %s179 = scalar_lea.vmem [#allocation2], %s178
          %s181 = ssub.s32 256, 256
          %182 = vsyncadd %s176, %s181
          %s183 = smul.addr %s23, 2
          %s184 = smul.addr %s183, 128
          %s185 = scalar_lea.hbm %s0, %s184
          %s186 = sshll.u32 %s179, 4
          %s187 = int_to_ptr.vmem [resolvable:$true] %s186
          %192 = dma.hbm_to_vmem [thread:$0]  %s185, 256, %s187, %s176, 128, 128, 8
        $region20: #{tpu_custom_call.1} parent=15 // pred_fallthru
          _
        // Predicated region
        $region21: #{tpu_custom_call.1} parent=15 // pred_check
          %p193 = pneg %p69
        $region22: #{tpu_custom_call.1} parent=15 // pred_check_branch
          %195 = sbr.rel (%p193) target = $region24
        $region23: #{tpu_custom_call.1} parent=15 // pred_region
          %s196 = sand.u32 %s59, 1
          %s197 = scalar_lea.sflag [#allocation6], %s196
          %s198 = sand.u32 %s59, 1
          %s199 = smul.addr %s198, 640
          %s200 = scalar_lea.vmem [#allocation5], %s199
          %s202 = ssub.s32 10240, 10240
          %203 = vsyncadd %s197, %s202
          %s204 = smul.addr %s23, 160
          %s205 = smul.addr %s204, 64
          %s206 = scalar_lea.hbm %s1, %s205
          %s207 = sshll.u32 %s200, 4
          %s208 = int_to_ptr.vmem [resolvable:$true] %s207
          %213 = dma.hbm_to_vmem [thread:$0]  %s206, 10240, %s208, %s197, 64, 64, 4
        $region24: #{tpu_custom_call.1} parent=15 // pred_fallthru
          _
        // Predicated region
        $region25: #{tpu_custom_call.1} parent=15 // pred_check
          %p214 = pneg %p95
        $region26: #{tpu_custom_call.1} parent=15 // pred_check_branch
          %216 = sbr.rel (%p214) target = $region28
        $region27: #{tpu_custom_call.1} parent=15 // pred_region
          %p217 = scmp.lt.s32.totalorder %s23, 1
          %s218 = scalar_select %p217, %s23, 1
          %s219 = smul.addr %s218, 8
          %s220 = scalar_lea.vmem %s2, %s219
        $region28: #{tpu_custom_call.1} parent=15 // pred_fallthru
          _
      $region16: #{tpu_custom_call.1} parent=5 // pred_fallthru
        _
      %p221 = scmp.le.s32.totalorder 1, %s23
      %p222 = scmp.lt.s32.totalorder %s23, 3
      %p223 = pnand %p221, %p222
      %p224 = pneg %p223
      // Predicated region
      $region29: #{tpu_custom_call.1} parent=5 // pred_check
        _
      $region30: #{tpu_custom_call.1} parent=5 // pred_check_branch
        %226 = sbr.rel (%p223) target = $region32
      $region31: #{tpu_custom_call.1} parent=5 // pred_region
        %s227 = ssub.s32 %s23, 1
        %s228 = sand.u32 %s36, 1
        %s229 = scalar_lea.sflag [#allocation3], %s228
        %s230 = sand.u32 %s36, 1
        %s231 = smul.addr %s230, 16
        %s232 = scalar_lea.vmem [#allocation2], %s231
        // Predicated region
        $region33: #{tpu_custom_call.1} parent=31 // pred_check
          %p233 = pneg %p49
        $region34: #{tpu_custom_call.1} parent=31 // pred_check_branch
          %235 = sbr.rel (%p233) target = $region36
        $region35: #{tpu_custom_call.1} parent=31 // pred_region
          %236 = dma.done %s229, 256
        $region36: #{tpu_custom_call.1} parent=31 // pred_fallthru
          _
        %s237 = sand.u32 %s62, 1
        %s238 = scalar_lea.sflag [#allocation6], %s237
        %s239 = sand.u32 %s62, 1
        %s240 = smul.addr %s239, 640
        %s241 = scalar_lea.vmem [#allocation5], %s240
        // Predicated region
        $region37: #{tpu_custom_call.1} parent=31 // pred_check
          %p242 = pneg %p75
        $region38: #{tpu_custom_call.1} parent=31 // pred_check_branch
          %244 = sbr.rel (%p242) target = $region40
        $region39: #{tpu_custom_call.1} parent=31 // pred_region
          %245 = dma.done %s238, 10240
        $region40: #{tpu_custom_call.1} parent=31 // pred_fallthru
          _
        %s246 = sand.u32 %s36, 1
        %s247 = scalar_lea.sflag [#allocation3], %s246
        %s248 = sand.u32 %s36, 1
        %s249 = smul.addr %s248, 16
        %s250 = scalar_lea.vmem [#allocation2], %s249
        %p251 = pneg %p49
        %p252 = pneg %p46
        %s253 = sand.u32 %s62, 1
        %s254 = scalar_lea.sflag [#allocation6], %s253
        %s255 = sand.u32 %s62, 1
        %s256 = smul.addr %s255, 640
        %s257 = scalar_lea.vmem [#allocation5], %s256
        %p258 = pneg %p75
        %p259 = pneg %p72
        %p260 = scmp.lt.s32.totalorder %s28, 1
        %s261 = scalar_select %p260, %s28, 1
        %s262 = smul.addr %s261, 8
        %s263 = scalar_lea.vmem %s2, %s262
        %p264 = pneg %p101
        %p265 = pneg %p98
        %p266 = pneg %p127
        %p267 = pneg %p124
        %s268 = sand.u32 %s114, 1
        %s269 = scalar_lea.sflag [#allocation4], %s268
        %s270 = sand.u32 %s114, 1
        %s271 = smul.addr %s270, 2
        %s272 = scalar_lea.vmem [#allocation7], %s271
        %p273 = pneg %p153
        %p274 = pneg %p150
        %s275 = sand.u32 %s140, 1
        %s276 = scalar_lea.sflag [#allocation9], %s275
        %s277 = sand.u32 %s140, 1
        %s278 = smul.addr %s277, 2
        %s279 = scalar_lea.vmem [#allocation8], %s278
        %p280 = scmp.lt.s32.totalorder %s28, 1
        %s281 = scalar_select %p280, %s28, 1
        %s282 = smul.addr %s281, 8
        %s283 = scalar_lea.vmem %s2, %s282
        %v285 = vld [vmem:[%s232] sm:$0xff]
        %v286 = vld [vmem:[%s232 + $0x8] sm:$0xff]
        %v287 = vld [vmem:[%s283] sm:$0x3f]
        %v288 = vlaneseq
        %v289 = vshrl.u32 %v288, 7
        %v290 = vadd.s32 %v289, 8
        %vm291 = vcmp.lt.s32.totalorder %v289, 0
        %v292 = vsub.s32 0, %v289
        %v293 = vsel %vm291, %v292, %v289
        %v294 = vshrl.u32 %v293, 3
        %v295 = vand.u32 %v293, 7
        %v296 = vsub.s32 0, %v295
        %v297 = vsel %vm291, %v296, %v295
        %vm298 = vcmp.lt.s32.totalorder %v290, 0
        %v299 = vsub.s32 0, %v290
        %v300 = vsel %vm298, %v299, %v290
        %v301 = vshrl.u32 %v300, 3
        %v302 = vand.u32 %v300, 7
        %v303 = vsub.s32 0, %v302
        %v304 = vsel %vm298, %v303, %v302
        %vm305 = vcmp.ne.s32.totalorder %v297, 0
        %vm306 = vcmp.ne.s32.totalorder %v304, 0
        %vm307 = vcmp.lt.s32.totalorder %v297, 0
        %vm308 = vcmp.lt.s32.totalorder %v304, 0
        %vm309 = vmand %vm307, %vm305
        %vm310 = vmand %vm308, %vm306
        %v311 = vadd.s32 %v297, 8
        %v312 = vadd.s32 %v304, 8
        %v313 = vsel %vm309, %v311, %v297
        %v314 = vsel %vm310, %v312, %v304
        %v315 = vld [vmem:[%s241] sm:$0xf]
        %v316 = vld [vmem:[%s241 + $0x4] sm:$0xf]
        %v317 = vld [vmem:[%s241 + $0x8] sm:$0xf]
        %v318 = vld [vmem:[%s241 + $0xc] sm:$0xf]
        %v319 = vld [vmem:[%s241 + $0x10] sm:$0xf]
        %v320 = vld [vmem:[%s241 + $0x14] sm:$0xf]
        %v321 = vld [vmem:[%s241 + $0x18] sm:$0xf]
        %v322 = vld [vmem:[%s241 + $0x1c] sm:$0xf]
        %v323 = vld [vmem:[%s241 + $0x20] sm:$0xf]
        %v324 = vld [vmem:[%s241 + $0x24] sm:$0xf]
        %v325 = vld [vmem:[%s241 + $0x28] sm:$0xf]
        %v326 = vld [vmem:[%s241 + $0x2c] sm:$0xf]
        %v327 = vld [vmem:[%s241 + $0x30] sm:$0xf]
        %v328 = vld [vmem:[%s241 + $0x34] sm:$0xf]
        %v329 = vld [vmem:[%s241 + $0x38] sm:$0xf]
        %v330 = vld [vmem:[%s241 + $0x3c] sm:$0xf]
        %v331 = vld [vmem:[%s241 + $0x40] sm:$0xf]
        %v332 = vld [vmem:[%s241 + $0x44] sm:$0xf]
        %v333 = vld [vmem:[%s241 + $0x48] sm:$0xf]
        %v334 = vld [vmem:[%s241 + $0x4c] sm:$0xf]
        %v335 = vld [vmem:[%s241 + $0x50] sm:$0xf]
        %v336 = vld [vmem:[%s241 + $0x54] sm:$0xf]
        %v337 = vld [vmem:[%s241 + $0x58] sm:$0xf]
        %v338 = vld [vmem:[%s241 + $0x5c] sm:$0xf]
        %v339 = vld [vmem:[%s241 + $0x60] sm:$0xf]
        %v340 = vld [vmem:[%s241 + $0x64] sm:$0xf]
        %v341 = vld [vmem:[%s241 + $0x68] sm:$0xf]
        %v342 = vld [vmem:[%s241 + $0x6c] sm:$0xf]
        %v343 = vld [vmem:[%s241 + $0x70] sm:$0xf]
        %v344 = vld [vmem:[%s241 + $0x74] sm:$0xf]
        %v345 = vld [vmem:[%s241 + $0x78] sm:$0xf]
        %v346 = vld [vmem:[%s241 + $0x7c] sm:$0xf]
        %v347 = vld [vmem:[%s241 + $0x80] sm:$0xf]
        %v348 = vld [vmem:[%s241 + $0x84] sm:$0xf]
        %v349 = vld [vmem:[%s241 + $0x88] sm:$0xf]
        %v350 = vld [vmem:[%s241 + $0x8c] sm:$0xf]
        %v351 = vld [vmem:[%s241 + $0x90] sm:$0xf]
        %v352 = vld [vmem:[%s241 + $0x94] sm:$0xf]
        %v353 = vld [vmem:[%s241 + $0x98] sm:$0xf]
        %v354 = vld [vmem:[%s241 + $0x9c] sm:$0xf]
        %v355 = vld [vmem:[%s241 + $0xa0] sm:$0xf]
        %v356 = vld [vmem:[%s241 + $0xa4] sm:$0xf]
        %v357 = vld [vmem:[%s241 + $0xa8] sm:$0xf]
        %v358 = vld [vmem:[%s241 + $0xac] sm:$0xf]
        %v359 = vld [vmem:[%s241 + $0xb0] sm:$0xf]
        %v360 = vld [vmem:[%s241 + $0xb4] sm:$0xf]
        %v361 = vld [vmem:[%s241 + $0xb8] sm:$0xf]
        %v362 = vld [vmem:[%s241 + $0xbc] sm:$0xf]
        %v363 = vld [vmem:[%s241 + $0xc0] sm:$0xf]
        %v364 = vld [vmem:[%s241 + $0xc4] sm:$0xf]
        %v365 = vld [vmem:[%s241 + $0xc8] sm:$0xf]
        %v366 = vld [vmem:[%s241 + $0xcc] sm:$0xf]
        %v367 = vld [vmem:[%s241 + $0xd0] sm:$0xf]
        %v368 = vld [vmem:[%s241 + $0xd4] sm:$0xf]
        %v369 = vld [vmem:[%s241 + $0xd8] sm:$0xf]
        %v370 = vld [vmem:[%s241 + $0xdc] sm:$0xf]
        %v371 = vld [vmem:[%s241 + $0xe0] sm:$0xf]
        %v372 = vld [vmem:[%s241 + $0xe4] sm:$0xf]
        %v373 = vld [vmem:[%s241 + $0xe8] sm:$0xf]
        %v374 = vld [vmem:[%s241 + $0xec] sm:$0xf]
        %v375 = vld [vmem:[%s241 + $0xf0] sm:$0xf]
        %v376 = vld [vmem:[%s241 + $0xf4] sm:$0xf]
        %v377 = vld [vmem:[%s241 + $0xf8] sm:$0xf]
        %v378 = vld [vmem:[%s241 + $0xfc] sm:$0xf]
        %v379 = vpack.c.bf16 %v286, %v285
        %vm380 = vcmp.ge.s32.totalorder %v313, 1
        %vm381 = vcmp.ge.s32.totalorder %v314, 1
        %v382 = vrot.slane %v285, 7
        %v383 = vrot.slane %v286, 7
        %vm384 = vcmp.lt.s32.totalorder %v289, 1
        %v385 = vsel %vm384, %v382, %v383
        %v386 = vsel %vm384, %v383, %v382
        %v387 = vsel %vm380, 1, 0
        %v388 = vsel %vm381, 1, 0
        %vm389 = vcmp.eq.s32.totalorder %v387, 1
        %vm390 = vcmp.eq.s32.totalorder %v388, 1
        %v391 = vsel %vm389, %v386, 0.0
        %v392 = vsel %vm390, %v385, 0.0
        %v393 = vpack.c.bf16 %v392, %v391
        %v394 = vlaneseq
        %v395 = vshrl.u32 %v394, 7
        %v396 = vsub.s32 0, %v395
        %v397 = vrot.slane %v287, %v396
        %v430 = vunpack.c.l.b16 %v315
        %v431 = vunpack.c.l.b16 %v316
        %v432 = vunpack.c.l.b16 %v317
        %v433 = vunpack.c.l.b16 %v318
        %v434 = vunpack.c.l.b16 %v319
        %v435 = vunpack.c.l.b16 %v320
        %v436 = vunpack.c.l.b16 %v321
        %v437 = vunpack.c.l.b16 %v322
        %v438 = vunpack.c.l.b16 %v323
        %v439 = vunpack.c.l.b16 %v324
        %v440 = vunpack.c.l.b16 %v325
        %v441 = vunpack.c.l.b16 %v326
        %v442 = vunpack.c.l.b16 %v327
        %v443 = vunpack.c.l.b16 %v328
        %v444 = vunpack.c.l.b16 %v329
        %v445 = vunpack.c.l.b16 %v330
        %v446 = vunpack.c.l.b16 %v331
        %v447 = vunpack.c.l.b16 %v332
        %v448 = vunpack.c.l.b16 %v333
        %v449 = vunpack.c.l.b16 %v334
        %v450 = vunpack.c.l.b16 %v335
        %v451 = vunpack.c.l.b16 %v336
        %v452 = vunpack.c.l.b16 %v337
        %v453 = vunpack.c.l.b16 %v338
        %v454 = vunpack.c.l.b16 %v339
        %v455 = vunpack.c.l.b16 %v340
        %v456 = vunpack.c.l.b16 %v341
        %v457 = vunpack.c.l.b16 %v342
        %v458 = vunpack.c.l.b16 %v343
        %v459 = vunpack.c.l.b16 %v344
        %v460 = vunpack.c.l.b16 %v345
        %v461 = vunpack.c.l.b16 %v346
        %v462 = vpack.c.b16 %v431, %v430
        %v463 = vpack.c.b16 %v433, %v432
        %v464 = vpack.c.b16 %v435, %v434
        %v465 = vpack.c.b16 %v437, %v436
        %v466 = vpack.c.b16 %v439, %v438
        %v467 = vpack.c.b16 %v441, %v440
        %v468 = vpack.c.b16 %v443, %v442
        %v469 = vpack.c.b16 %v445, %v444
        %v470 = vpack.c.b16 %v447, %v446
        %v471 = vpack.c.b16 %v449, %v448
        %v472 = vpack.c.b16 %v451, %v450
        %v473 = vpack.c.b16 %v453, %v452
        %v474 = vpack.c.b16 %v455, %v454
        %v475 = vpack.c.b16 %v457, %v456
        %v476 = vpack.c.b16 %v459, %v458
        %v477 = vpack.c.b16 %v461, %v460
        %494 = vmatprep.subr.bf16.mxu0 0
        %495 = vmatpush1.bf16.msra.mxu0 %v469
        %496 = vmatprep.subr.bf16.mxu0 0
        %497 = vmatpush1.bf16.msra.mxu0 %v468
        %498 = vmatprep.subr.bf16.mxu0 0
        %499 = vmatpush1.bf16.msra.mxu0 %v467
        %500 = vmatprep.subr.bf16.mxu0 0
        %501 = vmatpush1.bf16.msra.mxu0 %v466
        %502 = vmatprep.subr.bf16.mxu0 0
        %503 = vmatpush1.bf16.msra.mxu0 %v465
        %504 = vmatprep.subr.bf16.mxu0 0
        %505 = vmatpush1.bf16.msra.mxu0 %v464
        %506 = vmatprep.subr.bf16.mxu0 0
        %507 = vmatpush1.bf16.msra.mxu0 %v463
        %508 = vmatprep.subr.bf16.mxu0 0
        %509 = vmatpush1.bf16.msra.mxu0 %v462
        %510 = vmatprep.subr.bf16.mxu0 0
        %511 = vmatpush2.bf16.msra.mxu0 %v477
        %512 = vmatprep.subr.bf16.mxu0 0
        %513 = vmatpush2.bf16.msra.mxu0 %v476
        %514 = vmatprep.subr.bf16.mxu0 0
        %515 = vmatpush2.bf16.msra.mxu0 %v475
        %516 = vmatprep.subr.bf16.mxu0 0
        %517 = vmatpush2.bf16.msra.mxu0 %v474
        %518 = vmatprep.subr.bf16.mxu0 0
        %519 = vmatpush2.bf16.msra.mxu0 %v473
        %520 = vmatprep.subr.bf16.mxu0 0
        %521 = vmatpush2.bf16.msra.mxu0 %v472
        %522 = vmatprep.subr.bf16.mxu0 0
        %523 = vmatpush2.bf16.msra.mxu0 %v471
        %524 = vmatprep.subr.bf16.mxu0 0
        %525 = vmatpush2.bf16.msra.mxu0 %v470
        %526 = vmatprep.mubr.bf16.mxu0 %v379
        %527 = vmatmul.mubr.bf16.gmra.mxu0 %v393
        %v528 = vpop.f32.mrf.mxu0
        %v529 = vadd.f32 %v397, %v528
        %v530 = vpop.f32.mrf.mxu0
        %v531 = vpop.f32.mrf.mxu0
        %v532 = vadd.f32 %v397, %v531
        %v533 = vpop.f32.mrf.mxu0
        %534 = vdwg.mxu0
        %v535 = vmax.f32 %v529, 0.0
        %v536 = vmax.f32 %v532, 0.0
        %v537 = vpack.c.bf16 %v536, %v535
        %v538 = vrot.slane %v535, 7
        %v539 = vrot.slane %v536, 7
        %v540 = vsel %vm384, %v538, %v539
        %v541 = vsel %vm384, %v539, %v538
        %v542 = vsel %vm389, %v541, 0.0
        %v543 = vsel %vm390, %v540, 0.0
        %v544 = vpack.c.bf16 %v543, %v542
        %v545 = vlaneseq
        %v546 = vshrl.u32 %v545, 7
        %v547 = vsub.s32 1, %v546
        %v548 = vrot.slane %v287, %v547
        %v581 = vunpack.c.l.b16 %v347
        %v582 = vunpack.c.l.b16 %v348
        %v583 = vunpack.c.l.b16 %v349
        %v584 = vunpack.c.l.b16 %v350
        %v585 = vunpack.c.l.b16 %v351
        %v586 = vunpack.c.l.b16 %v352
        %v587 = vunpack.c.l.b16 %v353
        %v588 = vunpack.c.l.b16 %v354
        %v589 = vunpack.c.l.b16 %v355
        %v590 = vunpack.c.l.b16 %v356
        %v591 = vunpack.c.l.b16 %v357
        %v592 = vunpack.c.l.b16 %v358
        %v593 = vunpack.c.l.b16 %v359
        %v594 = vunpack.c.l.b16 %v360
        %v595 = vunpack.c.l.b16 %v361
        %v596 = vunpack.c.l.b16 %v362
        %v597 = vunpack.c.l.b16 %v363
        %v598 = vunpack.c.l.b16 %v364
        %v599 = vunpack.c.l.b16 %v365
        %v600 = vunpack.c.l.b16 %v366
        %v601 = vunpack.c.l.b16 %v367
        %v602 = vunpack.c.l.b16 %v368
        %v603 = vunpack.c.l.b16 %v369
        %v604 = vunpack.c.l.b16 %v370
        %v605 = vunpack.c.l.b16 %v371
        %v606 = vunpack.c.l.b16 %v372
        %v607 = vunpack.c.l.b16 %v373
        %v608 = vunpack.c.l.b16 %v374
        %v609 = vunpack.c.l.b16 %v375
        %v610 = vunpack.c.l.b16 %v376
        %v611 = vunpack.c.l.b16 %v377
        %v612 = vunpack.c.l.b16 %v378
        %v613 = vpack.c.b16 %v582, %v581
        %v614 = vpack.c.b16 %v584, %v583
        %v615 = vpack.c.b16 %v586, %v585
        %v616 = vpack.c.b16 %v588, %v587
        %v617 = vpack.c.b16 %v590, %v589
        %v618 = vpack.c.b16 %v592, %v591
        %v619 = vpack.c.b16 %v594, %v593
        %v620 = vpack.c.b16 %v596, %v595
        %v621 = vpack.c.b16 %v598, %v597
        %v622 = vpack.c.b16 %v600, %v599
        %v623 = vpack.c.b16 %v602, %v601
        %v624 = vpack.c.b16 %v604, %v603
        %v625 = vpack.c.b16 %v606, %v605
        %v626 = vpack.c.b16 %v608, %v607
        %v627 = vpack.c.b16 %v610, %v609
        %v628 = vpack.c.b16 %v612, %v611
        %645 = vmatprep.subr.bf16.mxu0 0
        %646 = vmatpush1.bf16.msra.mxu0 %v620
        %647 = vmatprep.subr.bf16.mxu0 0
        %648 = vmatpush1.bf16.msra.mxu0 %v619
        %649 = vmatprep.subr.bf16.mxu0 0
        %650 = vmatpush1.bf16.msra.mxu0 %v618
        %651 = vmatprep.subr.bf16.mxu0 0
        %652 = vmatpush1.bf16.msra.mxu0 %v617
        %653 = vmatprep.subr.bf16.mxu0 0
        %654 = vmatpush1.bf16.msra.mxu0 %v616
        %655 = vmatprep.subr.bf16.mxu0 0
        %656 = vmatpush1.bf16.msra.mxu0 %v615
        %657 = vmatprep.subr.bf16.mxu0 0
        %658 = vmatpush1.bf16.msra.mxu0 %v614
        %659 = vmatprep.subr.bf16.mxu0 0
        %660 = vmatpush1.bf16.msra.mxu0 %v613
        %661 = vmatprep.subr.bf16.mxu0 0
        %662 = vmatpush2.bf16.msra.mxu0 %v628
        %663 = vmatprep.subr.bf16.mxu0 0
        %664 = vmatpush2.bf16.msra.mxu0 %v627
        %665 = vmatprep.subr.bf16.mxu0 0
        %666 = vmatpush2.bf16.msra.mxu0 %v626
        %667 = vmatprep.subr.bf16.mxu0 0
        %668 = vmatpush2.bf16.msra.mxu0 %v625
        %669 = vmatprep.subr.bf16.mxu0 0
        %670 = vmatpush2.bf16.msra.mxu0 %v624
        %671 = vmatprep.subr.bf16.mxu0 0
        %672 = vmatpush2.bf16.msra.mxu0 %v623
        %673 = vmatprep.subr.bf16.mxu0 0
        %674 = vmatpush2.bf16.msra.mxu0 %v622
        %675 = vmatprep.subr.bf16.mxu0 0
        %676 = vmatpush2.bf16.msra.mxu0 %v621
        %677 = vmatprep.mubr.bf16.mxu0 %v537
        %678 = vmatmul.mubr.bf16.gmra.mxu0 %v544
        %v679 = vpop.f32.mrf.mxu0
        %v680 = vadd.f32 %v548, %v679
        %v681 = vpop.f32.mrf.mxu0
        %v682 = vpop.f32.mrf.mxu0
        %v683 = vadd.f32 %v548, %v682
        %v684 = vpop.f32.mrf.mxu0
        %685 = vdwg.mxu0
        %v686 = vmax.f32 %v680, 0.0
        %v687 = vmax.f32 %v683, 0.0
        %v688 = vld [vmem:[%s241 + $0x100] sm:$0xf]
        %v689 = vld [vmem:[%s241 + $0x104] sm:$0xf]
        %v690 = vld [vmem:[%s241 + $0x108] sm:$0xf]
        %v691 = vld [vmem:[%s241 + $0x10c] sm:$0xf]
        %v692 = vld [vmem:[%s241 + $0x110] sm:$0xf]
        %v693 = vld [vmem:[%s241 + $0x114] sm:$0xf]
        %v694 = vld [vmem:[%s241 + $0x118] sm:$0xf]
        %v695 = vld [vmem:[%s241 + $0x11c] sm:$0xf]
        %v696 = vld [vmem:[%s241 + $0x120] sm:$0xf]
        %v697 = vld [vmem:[%s241 + $0x124] sm:$0xf]
        %v698 = vld [vmem:[%s241 + $0x128] sm:$0xf]
        %v699 = vld [vmem:[%s241 + $0x12c] sm:$0xf]
        %v700 = vld [vmem:[%s241 + $0x130] sm:$0xf]
        %v701 = vld [vmem:[%s241 + $0x134] sm:$0xf]
        %v702 = vld [vmem:[%s241 + $0x138] sm:$0xf]
        %v703 = vld [vmem:[%s241 + $0x13c] sm:$0xf]
        %v704 = vlaneseq
        %v705 = vshrl.u32 %v704, 7
        %v706 = vsub.s32 2, %v705
        %v707 = vrot.slane %v287, %v706
        %v724 = vunpack.c.l.b16 %v688
        %v725 = vunpack.c.l.b16 %v689
        %v726 = vunpack.c.l.b16 %v690
        %v727 = vunpack.c.l.b16 %v691
        %v728 = vunpack.c.l.b16 %v692
        %v729 = vunpack.c.l.b16 %v693
        %v730 = vunpack.c.l.b16 %v694
        %v731 = vunpack.c.l.b16 %v695
        %v732 = vunpack.c.l.b16 %v696
        %v733 = vunpack.c.l.b16 %v697
        %v734 = vunpack.c.l.b16 %v698
        %v735 = vunpack.c.l.b16 %v699
        %v736 = vunpack.c.l.b16 %v700
        %v737 = vunpack.c.l.b16 %v701
        %v738 = vunpack.c.l.b16 %v702
        %v739 = vunpack.c.l.b16 %v703
        %v740 = vpack.c.b16 %v725, %v724
        %v741 = vpack.c.b16 %v727, %v726
        %v742 = vpack.c.b16 %v729, %v728
        %v743 = vpack.c.b16 %v731, %v730
        %v744 = vpack.c.b16 %v733, %v732
        %v745 = vpack.c.b16 %v735, %v734
        %v746 = vpack.c.b16 %v737, %v736
        %v747 = vpack.c.b16 %v739, %v738
        %756 = vmatprep.subr.bf16.mxu0 0
        %757 = vmatpush1.bf16.msra.mxu0 %v747
        %758 = vmatprep.subr.bf16.mxu0 0
        %759 = vmatpush1.bf16.msra.mxu0 %v746
        %760 = vmatprep.subr.bf16.mxu0 0
        %761 = vmatpush1.bf16.msra.mxu0 %v745
        %762 = vmatprep.subr.bf16.mxu0 0
        %763 = vmatpush1.bf16.msra.mxu0 %v744
        %764 = vmatprep.subr.bf16.mxu0 0
        %765 = vmatpush1.bf16.msra.mxu0 %v743
        %766 = vmatprep.subr.bf16.mxu0 0
        %767 = vmatpush1.bf16.msra.mxu0 %v742
        %768 = vmatprep.subr.bf16.mxu0 0
        %769 = vmatpush1.bf16.msra.mxu0 %v741
        %770 = vmatprep.subr.bf16.mxu0 0
        %771 = vmatpush1.bf16.msra.mxu0 %v740
        %772 = vmatprep.subr.bf16.mxu0 0
        %773 = vmatpush2.bf16.msra.mxu0 0
        %774 = vmatprep.subr.bf16.mxu0 0
        %775 = vmatpush2.bf16.msra.mxu0 0
        %776 = vmatprep.subr.bf16.mxu0 0
        %777 = vmatpush2.bf16.msra.mxu0 0
        %778 = vmatprep.subr.bf16.mxu0 0
        %779 = vmatpush2.bf16.msra.mxu0 0
        %780 = vmatprep.subr.bf16.mxu0 0
        %781 = vmatpush2.bf16.msra.mxu0 0
        %782 = vmatprep.subr.bf16.mxu0 0
        %783 = vmatpush2.bf16.msra.mxu0 0
        %784 = vmatprep.subr.bf16.mxu0 0
        %785 = vmatpush2.bf16.msra.mxu0 0
        %786 = vmatprep.subr.bf16.mxu0 0
        %787 = vmatpush2.bf16.msra.mxu0 0
        %788 = vmatprep.mubr.bf16.mxu0 0
        %789 = vmatmul.mubr.bf16.gmra.mxu0 %v379
        %v790 = vpop.f32.mrf.mxu0
        %v791 = vadd.f32 %v707, %v790
        %v792 = vpop.f32.mrf.mxu0
        %v793 = vpop.f32.mrf.mxu0
        %v794 = vadd.f32 %v707, %v793
        %v795 = vpop.f32.mrf.mxu0
        %796 = vdwg.mxu0
        %v797 = vadd.f32 %v686, %v791
        %v798 = vadd.f32 %v687, %v794
        %v799 = vmax.f32 %v797, 0.0
        %v800 = vmax.f32 %v798, 0.0
        %v801 = vld [vmem:[%s241 + $0x140] sm:$0xf]
        %v802 = vld [vmem:[%s241 + $0x144] sm:$0xf]
        %v803 = vld [vmem:[%s241 + $0x148] sm:$0xf]
        %v804 = vld [vmem:[%s241 + $0x14c] sm:$0xf]
        %v805 = vld [vmem:[%s241 + $0x150] sm:$0xf]
        %v806 = vld [vmem:[%s241 + $0x154] sm:$0xf]
        %v807 = vld [vmem:[%s241 + $0x158] sm:$0xf]
        %v808 = vld [vmem:[%s241 + $0x15c] sm:$0xf]
        %v809 = vld [vmem:[%s241 + $0x160] sm:$0xf]
        %v810 = vld [vmem:[%s241 + $0x164] sm:$0xf]
        %v811 = vld [vmem:[%s241 + $0x168] sm:$0xf]
        %v812 = vld [vmem:[%s241 + $0x16c] sm:$0xf]
        %v813 = vld [vmem:[%s241 + $0x170] sm:$0xf]
        %v814 = vld [vmem:[%s241 + $0x174] sm:$0xf]
        %v815 = vld [vmem:[%s241 + $0x178] sm:$0xf]
        %v816 = vld [vmem:[%s241 + $0x17c] sm:$0xf]
        %v817 = vld [vmem:[%s241 + $0x180] sm:$0xf]
        %v818 = vld [vmem:[%s241 + $0x184] sm:$0xf]
        %v819 = vld [vmem:[%s241 + $0x188] sm:$0xf]
        %v820 = vld [vmem:[%s241 + $0x18c] sm:$0xf]
        %v821 = vld [vmem:[%s241 + $0x190] sm:$0xf]
        %v822 = vld [vmem:[%s241 + $0x194] sm:$0xf]
        %v823 = vld [vmem:[%s241 + $0x198] sm:$0xf]
        %v824 = vld [vmem:[%s241 + $0x19c] sm:$0xf]
        %v825 = vld [vmem:[%s241 + $0x1a0] sm:$0xf]
        %v826 = vld [vmem:[%s241 + $0x1a4] sm:$0xf]
        %v827 = vld [vmem:[%s241 + $0x1a8] sm:$0xf]
        %v828 = vld [vmem:[%s241 + $0x1ac] sm:$0xf]
        %v829 = vld [vmem:[%s241 + $0x1b0] sm:$0xf]
        %v830 = vld [vmem:[%s241 + $0x1b4] sm:$0xf]
        %v831 = vld [vmem:[%s241 + $0x1b8] sm:$0xf]
        %v832 = vld [vmem:[%s241 + $0x1bc] sm:$0xf]
        %v833 = vld [vmem:[%s241 + $0x1c0] sm:$0xf]
        %v834 = vld [vmem:[%s241 + $0x1c4] sm:$0xf]
        %v835 = vld [vmem:[%s241 + $0x1c8] sm:$0xf]
        %v836 = vld [vmem:[%s241 + $0x1cc] sm:$0xf]
        %v837 = vld [vmem:[%s241 + $0x1d0] sm:$0xf]
        %v838 = vld [vmem:[%s241 + $0x1d4] sm:$0xf]
        %v839 = vld [vmem:[%s241 + $0x1d8] sm:$0xf]
        %v840 = vld [vmem:[%s241 + $0x1dc] sm:$0xf]
        %v841 = vld [vmem:[%s241 + $0x1e0] sm:$0xf]
        %v842 = vld [vmem:[%s241 + $0x1e4] sm:$0xf]
        %v843 = vld [vmem:[%s241 + $0x1e8] sm:$0xf]
        %v844 = vld [vmem:[%s241 + $0x1ec] sm:$0xf]
        %v845 = vld [vmem:[%s241 + $0x1f0] sm:$0xf]
        %v846 = vld [vmem:[%s241 + $0x1f4] sm:$0xf]
        %v847 = vld [vmem:[%s241 + $0x1f8] sm:$0xf]
        %v848 = vld [vmem:[%s241 + $0x1fc] sm:$0xf]
        %v849 = vld [vmem:[%s241 + $0x200] sm:$0xf]
        %v850 = vld [vmem:[%s241 + $0x204] sm:$0xf]
        %v851 = vld [vmem:[%s241 + $0x208] sm:$0xf]
        %v852 = vld [vmem:[%s241 + $0x20c] sm:$0xf]
        %v853 = vld [vmem:[%s241 + $0x210] sm:$0xf]
        %v854 = vld [vmem:[%s241 + $0x214] sm:$0xf]
        %v855 = vld [vmem:[%s241 + $0x218] sm:$0xf]
        %v856 = vld [vmem:[%s241 + $0x21c] sm:$0xf]
        %v857 = vld [vmem:[%s241 + $0x220] sm:$0xf]
        %v858 = vld [vmem:[%s241 + $0x224] sm:$0xf]
        %v859 = vld [vmem:[%s241 + $0x228] sm:$0xf]
        %v860 = vld [vmem:[%s241 + $0x22c] sm:$0xf]
        %v861 = vld [vmem:[%s241 + $0x230] sm:$0xf]
        %v862 = vld [vmem:[%s241 + $0x234] sm:$0xf]
        %v863 = vld [vmem:[%s241 + $0x238] sm:$0xf]
        %v864 = vld [vmem:[%s241 + $0x23c] sm:$0xf]
        %v865 = vpack.c.bf16 %v800, %v799
        %vm866 = vcmp.ge.s32.totalorder %v313, 2
        %vm867 = vcmp.ge.s32.totalorder %v314, 2
        %v868 = vrot.slane %v799, 6
        %v869 = vrot.slane %v800, 6
        %vm870 = vcmp.lt.s32.totalorder %v289, 2
        %v871 = vsel %vm870, %v868, %v869
        %v872 = vsel %vm870, %v869, %v868
        %v873 = vsel %vm866, 1, 0
        %v874 = vsel %vm867, 1, 0
        %vm875 = vcmp.eq.s32.totalorder %v873, 1
        %vm876 = vcmp.eq.s32.totalorder %v874, 1
        %v877 = vsel %vm875, %v872, 0.0
        %v878 = vsel %vm876, %v871, 0.0
        %v879 = vpack.c.bf16 %v878, %v877
        %v880 = vlaneseq
        %v881 = vshrl.u32 %v880, 7
        %v882 = vsub.s32 3, %v881
        %v883 = vrot.slane %v287, %v882
        %v916 = vunpack.c.l.b16 %v801
        %v917 = vunpack.c.l.b16 %v802
        %v918 = vunpack.c.l.b16 %v803
        %v919 = vunpack.c.l.b16 %v804
        %v920 = vunpack.c.l.b16 %v805
        %v921 = vunpack.c.l.b16 %v806
        %v922 = vunpack.c.l.b16 %v807
        %v923 = vunpack.c.l.b16 %v808
        %v924 = vunpack.c.l.b16 %v809
        %v925 = vunpack.c.l.b16 %v810
        %v926 = vunpack.c.l.b16 %v811
        %v927 = vunpack.c.l.b16 %v812
        %v928 = vunpack.c.l.b16 %v813
        %v929 = vunpack.c.l.b16 %v814
        %v930 = vunpack.c.l.b16 %v815
        %v931 = vunpack.c.l.b16 %v816
        %v932 = vunpack.c.l.b16 %v817
        %v933 = vunpack.c.l.b16 %v818
        %v934 = vunpack.c.l.b16 %v819
        %v935 = vunpack.c.l.b16 %v820
        %v936 = vunpack.c.l.b16 %v821
        %v937 = vunpack.c.l.b16 %v822
        %v938 = vunpack.c.l.b16 %v823
        %v939 = vunpack.c.l.b16 %v824
        %v940 = vunpack.c.l.b16 %v825
        %v941 = vunpack.c.l.b16 %v826
        %v942 = vunpack.c.l.b16 %v827
        %v943 = vunpack.c.l.b16 %v828
        %v944 = vunpack.c.l.b16 %v829
        %v945 = vunpack.c.l.b16 %v830
        %v946 = vunpack.c.l.b16 %v831
        %v947 = vunpack.c.l.b16 %v832
        %v948 = vpack.c.b16 %v917, %v916
        %v949 = vpack.c.b16 %v919, %v918
        %v950 = vpack.c.b16 %v921, %v920
        %v951 = vpack.c.b16 %v923, %v922
        %v952 = vpack.c.b16 %v925, %v924
        %v953 = vpack.c.b16 %v927, %v926
        %v954 = vpack.c.b16 %v929, %v928
        %v955 = vpack.c.b16 %v931, %v930
        %v956 = vpack.c.b16 %v933, %v932
        %v957 = vpack.c.b16 %v935, %v934
        %v958 = vpack.c.b16 %v937, %v936
        %v959 = vpack.c.b16 %v939, %v938
        %v960 = vpack.c.b16 %v941, %v940
        %v961 = vpack.c.b16 %v943, %v942
        %v962 = vpack.c.b16 %v945, %v944
        %v963 = vpack.c.b16 %v947, %v946
        %980 = vmatprep.subr.bf16.mxu0 0
        %981 = vmatpush1.bf16.msra.mxu0 %v955
        %982 = vmatprep.subr.bf16.mxu0 0
        %983 = vmatpush1.bf16.msra.mxu0 %v954
        %984 = vmatprep.subr.bf16.mxu0 0
        %985 = vmatpush1.bf16.msra.mxu0 %v953
        %986 = vmatprep.subr.bf16.mxu0 0
        %987 = vmatpush1.bf16.msra.mxu0 %v952
        %988 = vmatprep.subr.bf16.mxu0 0
        %989 = vmatpush1.bf16.msra.mxu0 %v951
        %990 = vmatprep.subr.bf16.mxu0 0
        %991 = vmatpush1.bf16.msra.mxu0 %v950
        %992 = vmatprep.subr.bf16.mxu0 0
        %993 = vmatpush1.bf16.msra.mxu0 %v949
        %994 = vmatprep.subr.bf16.mxu0 0
        %995 = vmatpush1.bf16.msra.mxu0 %v948
        %996 = vmatprep.subr.bf16.mxu0 0
        %997 = vmatpush2.bf16.msra.mxu0 %v963
        %998 = vmatprep.subr.bf16.mxu0 0
        %999 = vmatpush2.bf16.msra.mxu0 %v962
        %1000 = vmatprep.subr.bf16.mxu0 0
        %1001 = vmatpush2.bf16.msra.mxu0 %v961
        %1002 = vmatprep.subr.bf16.mxu0 0
        %1003 = vmatpush2.bf16.msra.mxu0 %v960
        %1004 = vmatprep.subr.bf16.mxu0 0
        %1005 = vmatpush2.bf16.msra.mxu0 %v959
        %1006 = vmatprep.subr.bf16.mxu0 0
        %1007 = vmatpush2.bf16.msra.mxu0 %v958
        %1008 = vmatprep.subr.bf16.mxu0 0
        %1009 = vmatpush2.bf16.msra.mxu0 %v957
        %1010 = vmatprep.subr.bf16.mxu0 0
        %1011 = vmatpush2.bf16.msra.mxu0 %v956
        %1012 = vmatprep.mubr.bf16.mxu0 %v865
        %1013 = vmatmul.mubr.bf16.gmra.mxu0 %v879
        %v1014 = vpop.f32.mrf.mxu0
        %v1015 = vadd.f32 %v883, %v1014
        %v1016 = vpop.f32.mrf.mxu0
        %v1017 = vpop.f32.mrf.mxu0
        %v1018 = vadd.f32 %v883, %v1017
        %v1019 = vpop.f32.mrf.mxu0
        %1020 = vdwg.mxu0
        %v1021 = vmax.f32 %v1015, 0.0
        %v1022 = vmax.f32 %v1018, 0.0
        %v1023 = vpack.c.bf16 %v1022, %v1021
        %v1024 = vrot.slane %v1021, 6
        %v1025 = vrot.slane %v1022, 6
        %v1026 = vsel %vm870, %v1024, %v1025
        %v1027 = vsel %vm870, %v1025, %v1024
        %v1028 = vsel %vm875, %v1027, 0.0
        %v1029 = vsel %vm876, %v1026, 0.0
        %v1030 = vpack.c.bf16 %v1029, %v1028
        %v1031 = vlaneseq
        %v1032 = vshrl.u32 %v1031, 7
        %v1033 = vsub.s32 4, %v1032
        %v1034 = vrot.slane %v287, %v1033
        %v1067 = vunpack.c.l.b16 %v833
        %v1068 = vunpack.c.l.b16 %v834
        %v1069 = vunpack.c.l.b16 %v835
        %v1070 = vunpack.c.l.b16 %v836
        %v1071 = vunpack.c.l.b16 %v837
        %v1072 = vunpack.c.l.b16 %v838
        %v1073 = vunpack.c.l.b16 %v839
        %v1074 = vunpack.c.l.b16 %v840
        %v1075 = vunpack.c.l.b16 %v841
        %v1076 = vunpack.c.l.b16 %v842
        %v1077 = vunpack.c.l.b16 %v843
        %v1078 = vunpack.c.l.b16 %v844
        %v1079 = vunpack.c.l.b16 %v845
        %v1080 = vunpack.c.l.b16 %v846
        %v1081 = vunpack.c.l.b16 %v847
        %v1082 = vunpack.c.l.b16 %v848
        %v1083 = vunpack.c.l.b16 %v849
        %v1084 = vunpack.c.l.b16 %v850
        %v1085 = vunpack.c.l.b16 %v851
        %v1086 = vunpack.c.l.b16 %v852
        %v1087 = vunpack.c.l.b16 %v853
        %v1088 = vunpack.c.l.b16 %v854
        %v1089 = vunpack.c.l.b16 %v855
        %v1090 = vunpack.c.l.b16 %v856
        %v1091 = vunpack.c.l.b16 %v857
        %v1092 = vunpack.c.l.b16 %v858
        %v1093 = vunpack.c.l.b16 %v859
        %v1094 = vunpack.c.l.b16 %v860
        %v1095 = vunpack.c.l.b16 %v861
        %v1096 = vunpack.c.l.b16 %v862
        %v1097 = vunpack.c.l.b16 %v863
        %v1098 = vunpack.c.l.b16 %v864
        %v1099 = vpack.c.b16 %v1068, %v1067
        %v1100 = vpack.c.b16 %v1070, %v1069
        %v1101 = vpack.c.b16 %v1072, %v1071
        %v1102 = vpack.c.b16 %v1074, %v1073
        %v1103 = vpack.c.b16 %v1076, %v1075
        %v1104 = vpack.c.b16 %v1078, %v1077
        %v1105 = vpack.c.b16 %v1080, %v1079
        %v1106 = vpack.c.b16 %v1082, %v1081
        %v1107 = vpack.c.b16 %v1084, %v1083
        %v1108 = vpack.c.b16 %v1086, %v1085
        %v1109 = vpack.c.b16 %v1088, %v1087
        %v1110 = vpack.c.b16 %v1090, %v1089
        %v1111 = vpack.c.b16 %v1092, %v1091
        %v1112 = vpack.c.b16 %v1094, %v1093
        %v1113 = vpack.c.b16 %v1096, %v1095
        %v1114 = vpack.c.b16 %v1098, %v1097
        %1131 = vmatprep.subr.bf16.mxu0 0
        %1132 = vmatpush1.bf16.msra.mxu0 %v1106
        %1133 = vmatprep.subr.bf16.mxu0 0
        %1134 = vmatpush1.bf16.msra.mxu0 %v1105
        %1135 = vmatprep.subr.bf16.mxu0 0
        %1136 = vmatpush1.bf16.msra.mxu0 %v1104
        %1137 = vmatprep.subr.bf16.mxu0 0
        %1138 = vmatpush1.bf16.msra.mxu0 %v1103
        %1139 = vmatprep.subr.bf16.mxu0 0
        %1140 = vmatpush1.bf16.msra.mxu0 %v1102
        %1141 = vmatprep.subr.bf16.mxu0 0
        %1142 = vmatpush1.bf16.msra.mxu0 %v1101
        %1143 = vmatprep.subr.bf16.mxu0 0
        %1144 = vmatpush1.bf16.msra.mxu0 %v1100
        %1145 = vmatprep.subr.bf16.mxu0 0
        %1146 = vmatpush1.bf16.msra.mxu0 %v1099
        %1147 = vmatprep.subr.bf16.mxu0 0
        %1148 = vmatpush2.bf16.msra.mxu0 %v1114
        %1149 = vmatprep.subr.bf16.mxu0 0
        %1150 = vmatpush2.bf16.msra.mxu0 %v1113
        %1151 = vmatprep.subr.bf16.mxu0 0
        %1152 = vmatpush2.bf16.msra.mxu0 %v1112
        %1153 = vmatprep.subr.bf16.mxu0 0
        %1154 = vmatpush2.bf16.msra.mxu0 %v1111
        %1155 = vmatprep.subr.bf16.mxu0 0
        %1156 = vmatpush2.bf16.msra.mxu0 %v1110
        %1157 = vmatprep.subr.bf16.mxu0 0
        %1158 = vmatpush2.bf16.msra.mxu0 %v1109
        %1159 = vmatprep.subr.bf16.mxu0 0
        %1160 = vmatpush2.bf16.msra.mxu0 %v1108
        %1161 = vmatprep.subr.bf16.mxu0 0
        %1162 = vmatpush2.bf16.msra.mxu0 %v1107
        %1163 = vmatprep.mubr.bf16.mxu0 %v1023
        %1164 = vmatmul.mubr.bf16.gmra.mxu0 %v1030
        %v1165 = vpop.f32.mrf.mxu0
        %v1166 = vadd.f32 %v1034, %v1165
        %v1167 = vpop.f32.mrf.mxu0
        %v1168 = vpop.f32.mrf.mxu0
        %v1169 = vadd.f32 %v1034, %v1168
        %v1170 = vpop.f32.mrf.mxu0
        %1171 = vdwg.mxu0
        %v1172 = vmax.f32 %v1166, 0.0
        %v1173 = vmax.f32 %v1169, 0.0
        %v1174 = vadd.f32 %v1172, %v799
        %v1175 = vadd.f32 %v1173, %v800
        %v1176 = vmax.f32 %v1174, 0.0
        %v1177 = vmax.f32 %v1175, 0.0
        %v1178 = vld [vmem:[%s241 + $0x240] sm:$0xf]
        %v1179 = vld [vmem:[%s241 + $0x244] sm:$0xf]
        %v1180 = vld [vmem:[%s241 + $0x248] sm:$0xf]
        %v1181 = vld [vmem:[%s241 + $0x24c] sm:$0xf]
        %v1182 = vld [vmem:[%s241 + $0x250] sm:$0xf]
        %v1183 = vld [vmem:[%s241 + $0x254] sm:$0xf]
        %v1184 = vld [vmem:[%s241 + $0x258] sm:$0xf]
        %v1185 = vld [vmem:[%s241 + $0x25c] sm:$0xf]
        %v1186 = vld [vmem:[%s241 + $0x260] sm:$0xf]
        %v1187 = vld [vmem:[%s241 + $0x264] sm:$0xf]
        %v1188 = vld [vmem:[%s241 + $0x268] sm:$0xf]
        %v1189 = vld [vmem:[%s241 + $0x26c] sm:$0xf]
        %v1190 = vld [vmem:[%s241 + $0x270] sm:$0xf]
        %v1191 = vld [vmem:[%s241 + $0x274] sm:$0xf]
        %v1192 = vld [vmem:[%s241 + $0x278] sm:$0xf]
        %v1193 = vld [vmem:[%s241 + $0x27c] sm:$0xf]
        %v1194 = vpack.c.bf16 %v1176, %v1176
        %v1195 = vpack.c.bf16 %v1177, %v1177
        %v1196 = vlaneseq
        %v1197 = vshrl.u32 %v1196, 7
        %v1198 = vsub.s32 5, %v1197
        %v1199 = vrot.slane %v287, %v1198
        %v1202 = vunpack.c.l.b16 %v1194
        %v1203 = vunpack.c.l.b16 %v1195
        %v1204 = vrot.slane %v1202, 7
        %v1205 = vrot.slane %v1203, 6
        %vm1206 = vcmask 1041409
        %v1207 = vsel %vm1206, %v1205, %v1204
        %v1208 = vpack.c.b16 %v1207, %v1207
        %v1226 = vunpack.c.l.b16 %v1178
        %v1227 = vunpack.c.l.b16 %v1179
        %v1228 = vunpack.c.l.b16 %v1180
        %v1229 = vunpack.c.l.b16 %v1181
        %v1230 = vunpack.c.l.b16 %v1182
        %v1231 = vunpack.c.l.b16 %v1183
        %v1232 = vunpack.c.l.b16 %v1184
        %v1233 = vunpack.c.l.b16 %v1185
        %v1234 = vunpack.c.l.b16 %v1186
        %v1235 = vunpack.c.l.b16 %v1187
        %v1236 = vunpack.c.l.b16 %v1188
        %v1237 = vunpack.c.l.b16 %v1189
        %v1238 = vunpack.c.l.b16 %v1190
        %v1239 = vunpack.c.l.b16 %v1191
        %v1240 = vunpack.c.l.b16 %v1192
        %v1241 = vunpack.c.l.b16 %v1193
        %v1242 = vpack.c.b16 %v1227, %v1226
        %v1243 = vpack.c.b16 %v1229, %v1228
        %v1244 = vpack.c.b16 %v1231, %v1230
        %v1245 = vpack.c.b16 %v1233, %v1232
        %v1246 = vpack.c.b16 %v1235, %v1234
        %v1247 = vpack.c.b16 %v1237, %v1236
        %v1248 = vpack.c.b16 %v1239, %v1238
        %v1249 = vpack.c.b16 %v1241, %v1240
        %1258 = vmatprep.subr.bf16.mxu0 0
        %1259 = vmatpush1.bf16.msra.mxu0 %v1249
        %1260 = vmatprep.subr.bf16.mxu0 0
        %1261 = vmatpush1.bf16.msra.mxu0 %v1248
        %1262 = vmatprep.subr.bf16.mxu0 0
        %1263 = vmatpush1.bf16.msra.mxu0 %v1247
        %1264 = vmatprep.subr.bf16.mxu0 0
        %1265 = vmatpush1.bf16.msra.mxu0 %v1246
        %1266 = vmatprep.subr.bf16.mxu0 0
        %1267 = vmatpush1.bf16.msra.mxu0 %v1245
        %1268 = vmatprep.subr.bf16.mxu0 0
        %1269 = vmatpush1.bf16.msra.mxu0 %v1244
        %1270 = vmatprep.subr.bf16.mxu0 0
        %1271 = vmatpush1.bf16.msra.mxu0 %v1243
        %1272 = vmatprep.subr.bf16.mxu0 0
        %1273 = vmatpush1.bf16.msra.mxu0 %v1242
        %1274 = vmatprep.subr.bf16.mxu0 0
        %1275 = vmatpush2.bf16.msra.mxu0 0
        %1276 = vmatprep.subr.bf16.mxu0 0
        %1277 = vmatpush2.bf16.msra.mxu0 0
        %1278 = vmatprep.subr.bf16.mxu0 0
        %1279 = vmatpush2.bf16.msra.mxu0 0
        %1280 = vmatprep.subr.bf16.mxu0 0
        %1281 = vmatpush2.bf16.msra.mxu0 0
        %1282 = vmatprep.subr.bf16.mxu0 0
        %1283 = vmatpush2.bf16.msra.mxu0 0
        %1284 = vmatprep.subr.bf16.mxu0 0
        %1285 = vmatpush2.bf16.msra.mxu0 0
        %1286 = vmatprep.subr.bf16.mxu0 0
        %1287 = vmatpush2.bf16.msra.mxu0 0
        %1288 = vmatprep.subr.bf16.mxu0 0
        %1289 = vmatpush2.bf16.msra.mxu0 0
        %1290 = vmatprep.mubr.bf16.mxu0 0
        %1291 = vmatmul.mubr.bf16.gmra.mxu0 %v1208
        %v1292 = vpop.f32.mrf.mxu0
        %v1293 = vadd.f32 %v1199, %v1292
        %v1294 = vpop.f32.mrf.mxu0
        %v1295 = vpop.f32.mrf.mxu0
        %v1296 = vpop.f32.mrf.mxu0
        %1297 = vdwg.mxu0
        %v1300 = vrot.slane %v1177, 7
        %1303 = vst [vmem:[%s272 - $0x7] sm:$0x80] %v1176
        %1304 = vst [vmem:[%s272 + $0x1] sm:$0x1] %v1300
        %1305 = vst [vmem:[%s279] sm:$0x3] %v1293
        %s1306 = sand.u32 %s114, 1
        %s1307 = scalar_lea.sflag [#allocation4], %s1306
        %s1308 = sand.u32 %s114, 1
        %s1309 = smul.addr %s1308, 2
        %s1310 = scalar_lea.vmem [#allocation7], %s1309
        %s1311 = sand.u32 %s140, 1
        %s1312 = scalar_lea.sflag [#allocation9], %s1311
        %s1313 = sand.u32 %s140, 1
        %s1314 = smul.addr %s1313, 2
        %s1315 = scalar_lea.vmem [#allocation8], %s1314
        // Predicated region
        $region41: #{tpu_custom_call.1} parent=31 // pred_check
          %p1316 = pneg %p124
        $region42: #{tpu_custom_call.1} parent=31 // pred_check_branch
          %1318 = sbr.rel (%p1316) target = $region44
        $region43: #{tpu_custom_call.1} parent=31 // pred_region
          %s1320 = ssub.s32 32, 32
          %1321 = vsyncadd %s1307, %s1320
          %s1322 = smul.addr %s28, 32
          %s1323 = scalar_lea.hbm %s3, %s1322
          %s1325 = sshll.u32 %s1310, 4
          %s1326 = int_to_ptr.vmem [resolvable:$true] %s1325
          %1328 = dma.vmem_to_hbm [thread:$0]  %s1326, 32, %s1323, %s1307
        $region44: #{tpu_custom_call.1} parent=31 // pred_fallthru
          _
        // Predicated region
        $region45: #{tpu_custom_call.1} parent=31 // pred_check
          %p1329 = pneg %p150
        $region46: #{tpu_custom_call.1} parent=31 // pred_check_branch
          %1331 = sbr.rel (%p1329) target = $region48
        $region47: #{tpu_custom_call.1} parent=31 // pred_region
          %s1333 = ssub.s32 32, 32
          %1334 = vsyncadd %s1312, %s1333
          %s1335 = smul.addr %s28, 32
          %s1336 = scalar_lea.hbm %s4, %s1335
          %s1338 = sshll.u32 %s1315, 4
          %s1339 = int_to_ptr.vmem [resolvable:$true] %s1338
          %1341 = dma.vmem_to_hbm [thread:$0]  %s1339, 32, %s1336, %s1312
        $region48: #{tpu_custom_call.1} parent=31 // pred_fallthru
          _
      $region32: #{tpu_custom_call.1} parent=5 // pred_fallthru
        _
      %p1342 = scmp.le.s32.totalorder 2, %s23
      // Predicated region
      $region49: #{tpu_custom_call.1} parent=5 // pred_check
        %p1343 = pneg %p1342
      $region50: #{tpu_custom_call.1} parent=5 // pred_check_branch
        %1345 = sbr.rel (%p1343) target = $region52
      $region51: #{tpu_custom_call.1} parent=5 // pred_region
        %s1346 = ssub.s32 %s23, 2
        // Predicated region
        $region53: #{tpu_custom_call.1} parent=51 // pred_check
          %p1347 = pneg %p130
        $region54: #{tpu_custom_call.1} parent=51 // pred_check_branch
          %1349 = sbr.rel (%p1347) target = $region56
        $region55: #{tpu_custom_call.1} parent=51 // pred_region
          %s1350 = sand.u32 %s115, 1
          %s1351 = scalar_lea.sflag [#allocation4], %s1350
          %s1352 = sand.u32 %s115, 1
          %s1353 = smul.addr %s1352, 2
          %s1354 = scalar_lea.vmem [#allocation7], %s1353
          %1355 = dma.done %s1351, 32
        $region56: #{tpu_custom_call.1} parent=51 // pred_fallthru
          _
        // Predicated region
        $region57: #{tpu_custom_call.1} parent=51 // pred_check
          %p1356 = pneg %p156
        $region58: #{tpu_custom_call.1} parent=51 // pred_check_branch
          %1358 = sbr.rel (%p1356) target = $region60
        $region59: #{tpu_custom_call.1} parent=51 // pred_region
          %s1359 = sand.u32 %s141, 1
          %s1360 = scalar_lea.sflag [#allocation9], %s1359
          %s1361 = sand.u32 %s141, 1
          %s1362 = smul.addr %s1361, 2
          %s1363 = scalar_lea.vmem [#allocation8], %s1362
          %1364 = dma.done %s1360, 32
        $region60: #{tpu_custom_call.1} parent=51 // pred_fallthru
          _
      $region52: #{tpu_custom_call.1} parent=5 // pred_fallthru
        _
    $region6: #{tpu_custom_call.1} parent=1 // loop_footer
      %s27 = sadd.s32 1, %s23
    $region7: #{tpu_custom_call.1} parent=1 // loop_footer_branch
      %22 = sbr.rel target = $region3
    $region8: #{tpu_custom_call.1} parent=1 // loop_exit
      _
    %1365 = vsyncpa [#allocation3], 1
    %s1366 = scalar_lea.sflag [#allocation3], 1
    %1367 = vsyncpa %s1366, 1
    %1368 = vsyncpa [#allocation6], 1
    %s1369 = scalar_lea.sflag [#allocation6], 1
    %1370 = vsyncpa %s1369, 1
    %1371 = vsyncpa [#allocation4], 1
    %s1372 = scalar_lea.sflag [#allocation4], 1
    %1373 = vsyncpa %s1372, 1
    %1374 = vsyncpa [#allocation9], 1
    %s1375 = scalar_lea.sflag [#allocation9], 1
    %1376 = vsyncpa %s1375, 1

</llo_original>
